<compile_context>
chip_gen: v5e
topology: v5e:2x2
jax: 0.10.0
libtpu: 0.0.40
codegen_flags: <defaults>
</compile_context>

<pallas_src>
import math
import functools

import jax
import jax.numpy as jnp
from jax.experimental import pallas as pl
from jax.experimental.pallas import tpu as pltpu


def _pick_tile(dim, candidates=(512, 256, 128)):
    """Largest candidate tile that evenly divides `dim`, else the full dim."""
    for c in candidates:
        if dim % c == 0:
            return c
    return dim


# --------------------------- tiled matmul kernels ---------------------------

def _matmul_bias_kernel(x_ref, w_ref, b_ref, o_ref, acc_ref):
    @pl.when(pl.program_id(2) == 0)
    def _init():
        acc_ref[...] = jnp.zeros_like(acc_ref)

    acc_ref[...] += jnp.dot(x_ref[...], w_ref[...],
                            preferred_element_type=jnp.float32)

    @pl.when(pl.program_id(2) == pl.num_programs(2) - 1)
    def _finalize():
        o_ref[...] = (acc_ref[...]
                      + b_ref[...].astype(jnp.float32)).astype(o_ref.dtype)


def _matmul_bias_residual_kernel(x_ref, w_ref, b_ref, r_ref, o_ref, acc_ref):
    @pl.when(pl.program_id(2) == 0)
    def _init():
        acc_ref[...] = jnp.zeros_like(acc_ref)

    acc_ref[...] += jnp.dot(x_ref[...], w_ref[...],
                            preferred_element_type=jnp.float32)

    @pl.when(pl.program_id(2) == pl.num_programs(2) - 1)
    def _finalize():
        o_ref[...] = (acc_ref[...]
                      + b_ref[...].astype(jnp.float32)
                      + r_ref[...].astype(jnp.float32)).astype(o_ref.dtype)


def matmul_bias(x, w, b, residual=None):
    """x:(M,K) @ w:(K,N) + b:(N,) [+ residual:(M,N)] -> (M,N).

    Tiled over (M, N, K); K is the trailing "arbitrary" reduction axis which
    accumulates into an f32 VMEM scratch. Operands are fed to the MXU in their
    native dtype; only the accumulator / epilogue is f32.
    """
    M, K = x.shape
    N = w.shape[1]
    tm = _pick_tile(M)
    tn = _pick_tile(N)
    tk = _pick_tile(K)
    grid = (M // tm, N // tn, K // tk)

    in_specs = [
        pl.BlockSpec((tm, tk), lambda i, j, k: (i, k)),
        pl.BlockSpec((tk, tn), lambda i, j, k: (k, j)),
        pl.BlockSpec((1, tn), lambda i, j, k: (0, j)),
    ]
    args = [x, w, b.reshape(1, N)]
    kernel = _matmul_bias_kernel
    if residual is not None:
        in_specs.append(pl.BlockSpec((tm, tn), lambda i, j, k: (i, j)))
        args.append(residual)
        kernel = _matmul_bias_residual_kernel

    return pl.pallas_call(
        kernel,
        out_shape=jax.ShapeDtypeStruct((M, N), x.dtype),
        grid=grid,
        in_specs=in_specs,
        out_specs=pl.BlockSpec((tm, tn), lambda i, j, k: (i, j)),
        scratch_shapes=[pltpu.VMEM((tm, tn), jnp.float32)],
        compiler_params=pltpu.CompilerParams(
            dimension_semantics=("parallel", "parallel", "arbitrary")),
    )(*args)


# ---------------------- depthwise 3x3 conv + GELU kernel --------------------

def _dwconv3x3_gelu_kernel(x_ref, w_ref, b_ref, o_ref, pad_ref, *, H, W):
    Fb = x_ref.shape[-1]
    # 1-pixel zero halo built in a VMEM scratch (no HBM jnp.pad round trip).
    pad_ref[...] = jnp.zeros_like(pad_ref)
    pad_ref[1:H + 1, 1:W + 1, :] = x_ref[0].astype(jnp.float32)
    xp = pad_ref[...]                                   # (H+2, W+2, Fb) f32
    w = w_ref[...].astype(jnp.float32)                  # (3, 3, Fb)

    acc = jnp.broadcast_to(b_ref[0].astype(jnp.float32), (H, W, Fb))
    for dy in range(3):
        for dx in range(3):
            acc = acc + xp[dy:dy + H, dx:dx + W, :] * w[dy, dx]

    # GELU activation.
    # TODO(synk): PyTorch nn.GELU defaults to the exact erf form; the tanh
    # approximation (~1e-3 abs diff) is used here for robust Mosaic lowering.
    c = math.sqrt(2.0 / math.pi)
    g = 0.5 * acc * (1.0 + jnp.tanh(c * (acc + 0.044715 * acc * acc * acc)))
    o_ref[0] = g.astype(o_ref.dtype)


def dwconv3x3_gelu(x, w, b):
    """x:(B,H,W,F) NHWC, w:(3,3,F), b:(F,) -> depthwise 3x3 (pad=1) + GELU."""
    B, H, W, F_ = x.shape
    # Lane-aligned channel blocks when possible; otherwise the full channel dim.
    fb = 128 if F_ % 128 == 0 else F_
    grid = (B, F_ // fb)
    # TODO(synk): for very large H (stage-1 SegFormer resolutions) add row-strip
    # tiling with an explicit row halo to stay inside v7x's 64 MiB VMEM.
    return pl.pallas_call(
        functools.partial(_dwconv3x3_gelu_kernel, H=H, W=W),
        out_shape=jax.ShapeDtypeStruct((B, H, W, F_), x.dtype),
        grid=grid,
        in_specs=[pl.BlockSpec((1, H, W, fb), lambda bi, ci: (bi, 0, 0, ci)),
                  pl.BlockSpec((3, 3, fb), lambda bi, ci: (0, 0, ci)),
                  pl.BlockSpec((1, fb), lambda bi, ci: (0, ci))],
        out_specs=pl.BlockSpec((1, H, W, fb), lambda bi, ci: (bi, 0, 0, ci)),
        scratch_shapes=[pltpu.VMEM((H + 2, W + 2, fb), jnp.float32)],
        compiler_params=pltpu.CompilerParams(
            dimension_semantics=("parallel", "parallel")),
    )(x, w, b.reshape(1, F_))


# ------------------------------- module glue --------------------------------

def init_params(key, C, F):
    ks = jax.random.split(key, 6)
    std = 0.02
    rnd = lambda k, shape: jax.random.normal(k, shape, jnp.float32) * std
    return dict(
        # Conv2d(C, F, 1)  -> matmul weight (C, F), bias (F,)
        fc1_w=rnd(ks[0], (C, F)), fc1_b=rnd(ks[1], (F,)),
        # Conv2d(F, F, 3, pad=1, groups=F) -> depthwise weight (3, 3, F), bias (F,)
        dw_w=rnd(ks[2], (3, 3, F)), dw_b=rnd(ks[3], (F,)),
        # Conv2d(F, C, 1)  -> matmul weight (F, C), bias (C,)
        fc2_w=rnd(ks[4], (F, C)), fc2_b=rnd(ks[5], (C,)),
    )


def mixffn_forward(params, x, *, hw_shape):
    """MixFFN forward. x: (B, N, C) with N = H*W (hw_shape static Python ints)."""
    B, N, C = x.shape
    H, W = hw_shape
    assert N == H * W, (N, H, W)
    F_ = params["fc1_w"].shape[1]

    x2d = x.reshape(B * N, C)
    # 1x1 conv C -> F (pointwise conv == per-token matmul over channels).
    h = matmul_bias(x2d, params["fc1_w"], params["fc1_b"])
    # Depthwise 3x3 (pad=1, groups=F) + GELU in NHWC; dropout(0) is identity.
    h = dwconv3x3_gelu(h.reshape(B, H, W, F_), params["dw_w"], params["dw_b"])
    # 1x1 conv F -> C with the residual (identity) add fused into the epilogue.
    out = matmul_bias(h.reshape(B * N, F_), params["fc2_w"], params["fc2_b"],
                      residual=x2d)
    return out.reshape(B, N, C)


# ----------------------------------- main ------------------------------------

if __name__ == "__main__":
    B, H, W = 2, 8, 8
    C, F = 32, 64
    N = H * W

    key = jax.random.PRNGKey(0)
    kx, kp = jax.random.split(key)
    x = jax.random.normal(kx, (B, N, C), jnp.float32)
    params = init_params(kp, C, F)

    fn = jax.jit(functools.partial(mixffn_forward, hw_shape=(H, W)))
    y = jax.block_until_ready(fn(params, x))

    assert y.shape == (B, N, C), y.shape
    assert bool(jnp.all(jnp.isfinite(y)))
    print("KERNEL_OK")
</pallas_src>

<mosaic_0001>
module attributes {stable_mosaic.version = 11 : i64} {
  func.func @_matmul_bias_kernel(%arg0: i32, %arg1: i32, %arg2: i32, %arg3: memref<128x32xf32, #tpu.memory_space<vmem>>, %arg4: memref<32x64xf32, #tpu.memory_space<vmem>>, %arg5: memref<1x64xf32, #tpu.memory_space<vmem>>, %arg6: memref<128x64xf32, #tpu.memory_space<vmem>>, %arg7: memref<128x64xf32, #tpu.memory_space<vmem>>) attributes {dimension_semantics = [#tpu.dimension_semantics<parallel>, #tpu.dimension_semantics<parallel>, #tpu.dimension_semantics<arbitrary>], iteration_bounds = array<i64: 1, 1, 1>, scalar_prefetch = 0 : i64, scratch_operands = 1 : i64, tpu.core_type = #tpu.core_type<tc>, window_params = [{transform_indices = @transform_0, window_bounds = array<i64: 128, 32>}, {transform_indices = @transform_1, window_bounds = array<i64: 32, 64>}, {transform_indices = @transform_2, window_bounds = array<i64: 1, 64>}, {transform_indices = @transform_3, window_bounds = array<i64: 128, 64>}]} {
    %c0_i32 = arith.constant 0 : i32
    %0 = arith.cmpi eq, %arg2, %c0_i32 : i32
    %1 = arith.extui %0 : i1 to i32
    %c0_i32_0 = arith.constant 0 : i32
    %2 = arith.cmpi ne, %1, %c0_i32_0 : i32
    scf.if %2 {
      %cst_10 = arith.constant 0.000000e+00 : f32
      %12 = vector.broadcast %cst_10 : f32 to vector<128x64xf32>
      %c0_11 = arith.constant 0 : index
      %c0_12 = arith.constant 0 : index
      %13 = vector.load %arg7[%c0_11, %c0_12] : memref<128x64xf32, #tpu.memory_space<vmem>>, vector<128x64xf32>
      tpu.vector_store %arg7[%c0_11, %c0_12], %12 {strides = array<i32>} : memref<128x64xf32, #tpu.memory_space<vmem>>, vector<128x64xf32>,
    } else {
    }
    %c0 = arith.constant 0 : index
    %c0_1 = arith.constant 0 : index
    %3 = vector.load %arg7[%c0, %c0_1] : memref<128x64xf32, #tpu.memory_space<vmem>>, vector<128x64xf32>
    %c0_2 = arith.constant 0 : index
    %c0_3 = arith.constant 0 : index
    %4 = vector.load %arg3[%c0_2, %c0_3] : memref<128x32xf32, #tpu.memory_space<vmem>>, vector<128x32xf32>
    %c0_4 = arith.constant 0 : index
    %c0_5 = arith.constant 0 : index
    %5 = vector.load %arg4[%c0_4, %c0_5] : memref<32x64xf32, #tpu.memory_space<vmem>>, vector<32x64xf32>
    %cst = arith.constant dense<0.000000e+00> : vector<128x64xf32>
    %6 = tpu.matmul %4, %5, %cst {dimension_numbers = #tpu.dot_dimension_numbers<[1], [0], [0], [1], [0, 0, 1, 1], [], []>} : vector<128x32xf32>, vector<32x64xf32>, vector<128x64xf32> -> vector<128x64xf32>
    %7 = arith.addf %3, %6 : vector<128x64xf32>
    %c0_6 = arith.constant 0 : index
    %c0_7 = arith.constant 0 : index
    %8 = vector.load %arg7[%c0_6, %c0_7] : memref<128x64xf32, #tpu.memory_space<vmem>>, vector<128x64xf32>
    tpu.vector_store %arg7[%c0_6, %c0_7], %7 {strides = array<i32>} : memref<128x64xf32, #tpu.memory_space<vmem>>, vector<128x64xf32>,
    %c0_i32_8 = arith.constant 0 : i32
    %9 = arith.cmpi eq, %arg2, %c0_i32_8 : i32
    %10 = arith.extui %9 : i1 to i32
    %c0_i32_9 = arith.constant 0 : i32
    %11 = arith.cmpi ne, %10, %c0_i32_9 : i32
    scf.if %11 {
      %c0_10 = arith.constant 0 : index
      %c0_11 = arith.constant 0 : index
      %12 = vector.load %arg7[%c0_10, %c0_11] : memref<128x64xf32, #tpu.memory_space<vmem>>, vector<128x64xf32>
      %c0_12 = arith.constant 0 : index
      %c0_13 = arith.constant 0 : index
      %13 = vector.load %arg5[%c0_12, %c0_13] : memref<1x64xf32, #tpu.memory_space<vmem>>, vector<1x64xf32>
      %14 = vector.broadcast %13 : vector<1x64xf32> to vector<128x64xf32>
      %15 = arith.addf %12, %14 : vector<128x64xf32>
      %c0_14 = arith.constant 0 : index
      %c0_15 = arith.constant 0 : index
      %16 = vector.load %arg6[%c0_14, %c0_15] : memref<128x64xf32, #tpu.memory_space<vmem>>, vector<128x64xf32>
      tpu.vector_store %arg6[%c0_14, %c0_15], %15 {strides = array<i32>} : memref<128x64xf32, #tpu.memory_space<vmem>>, vector<128x64xf32>,
    } else {
    }
    return
  }
  func.func @transform_0(%arg0: i32, %arg1: i32, %arg2: i32) -> (i32, i32) {
    %c0_i32 = arith.constant 0 : i32
    return %arg0, %arg2 : i32, i32
  }
  func.func @transform_1(%arg0: i32, %arg1: i32, %arg2: i32) -> (i32, i32) {
    %c0_i32 = arith.constant 0 : i32
    return %arg2, %arg1 : i32, i32
  }
  func.func @transform_2(%arg0: i32, %arg1: i32, %arg2: i32) -> (i32, i32) {
    %c0_i32 = arith.constant 0 : i32
    %c0_i32_0 = arith.constant 0 : i32
    return %c0_i32, %arg1 : i32, i32
  }
  func.func @transform_3(%arg0: i32, %arg1: i32, %arg2: i32) -> (i32, i32) {
    %c0_i32 = arith.constant 0 : i32
    return %arg0, %arg1 : i32, i32
  }
}

module attributes {stable_mosaic.version = 11 : i64} {
  func.func @_dwconv3x3_gelu_kernel(%arg0: i32, %arg1: i32, %arg2: memref<1x8x8x64xf32, #tpu.memory_space<vmem>>, %arg3: memref<3x3x64xf32, #tpu.memory_space<vmem>>, %arg4: memref<1x64xf32, #tpu.memory_space<vmem>>, %arg5: memref<1x8x8x64xf32, #tpu.memory_space<vmem>>, %arg6: memref<10x10x64xf32, #tpu.memory_space<vmem>>) attributes {dimension_semantics = [#tpu.dimension_semantics<parallel>, #tpu.dimension_semantics<parallel>], iteration_bounds = array<i64: 2, 1>, scalar_prefetch = 0 : i64, scratch_operands = 1 : i64, tpu.core_type = #tpu.core_type<tc>, window_params = [{transform_indices = @transform_0, window_bounds = array<i64: 1, 8, 8, 64>}, {transform_indices = @transform_1, window_bounds = array<i64: 3, 3, 64>}, {transform_indices = @transform_2, window_bounds = array<i64: 1, 64>}, {transform_indices = @transform_3, window_bounds = array<i64: 1, 8, 8, 64>}]} {
    %cst = arith.constant 0.000000e+00 : f32
    %0 = vector.broadcast %cst : f32 to vector<10x10x64xf32>
    %c0 = arith.constant 0 : index
    %c0_0 = arith.constant 0 : index
    %c0_1 = arith.constant 0 : index
    %1 = vector.load %arg6[%c0, %c0_0, %c0_1] : memref<10x10x64xf32, #tpu.memory_space<vmem>>, vector<10x10x64xf32>
    tpu.vector_store %arg6[%c0, %c0_0, %c0_1], %0 {strides = array<i32>} : memref<10x10x64xf32, #tpu.memory_space<vmem>>, vector<10x10x64xf32>,
    %c0_2 = arith.constant 0 : index
    %c0_3 = arith.constant 0 : index
    %c0_4 = arith.constant 0 : index
    %c0_5 = arith.constant 0 : index
    %2 = vector.load %arg2[%c0_2, %c0_3, %c0_4, %c0_5] : memref<1x8x8x64xf32, #tpu.memory_space<vmem>>, vector<1x8x8x64xf32>
    %3 = vector.shape_cast %2 : vector<1x8x8x64xf32> to vector<8x8x64xf32>
    %c1 = arith.constant 1 : index
    %c1_6 = arith.constant 1 : index
    %c0_7 = arith.constant 0 : index
    %4 = vector.load %arg6[%c1, %c1_6, %c0_7] : memref<10x10x64xf32, #tpu.memory_space<vmem>>, vector<8x8x64xf32>
    tpu.vector_store %arg6[%c1, %c1_6, %c0_7], %3 {strides = array<i32>} : memref<10x10x64xf32, #tpu.memory_space<vmem>>, vector<8x8x64xf32>,
    %c0_8 = arith.constant 0 : index
    %c0_9 = arith.constant 0 : index
    %c0_10 = arith.constant 0 : index
    %5 = vector.load %arg6[%c0_8, %c0_9, %c0_10] : memref<10x10x64xf32, #tpu.memory_space<vmem>>, vector<10x10x64xf32>
    %c0_11 = arith.constant 0 : index
    %c0_12 = arith.constant 0 : index
    %c0_13 = arith.constant 0 : index
    %6 = vector.load %arg3[%c0_11, %c0_12, %c0_13] : memref<3x3x64xf32, #tpu.memory_space<vmem>>, vector<3x3x64xf32>
    %c0_14 = arith.constant 0 : index
    %c0_15 = arith.constant 0 : index
    %7 = vector.load %arg4[%c0_14, %c0_15] : memref<1x64xf32, #tpu.memory_space<vmem>>, vector<1x64xf32>
    %8 = vector.shape_cast %7 : vector<1x64xf32> to vector<64xf32>
    %9 = vector.shape_cast %8 : vector<64xf32> to vector<1x1x64xf32>
    %10 = vector.broadcast %9 : vector<1x1x64xf32> to vector<8x8x64xf32>
    %11 = vector.extract_strided_slice %5 {offsets = [0, 0, 0], sizes = [8, 8, 64], strides = [1, 1, 1]} : vector<10x10x64xf32> to vector<8x8x64xf32>
    %12 = vector.extract_strided_slice %6 {offsets = [0, 0, 0], sizes = [1, 1, 64], strides = [1, 1, 1]} : vector<3x3x64xf32> to vector<1x1x64xf32>
    %13 = vector.shape_cast %12 : vector<1x1x64xf32> to vector<64xf32>
    %14 = vector.shape_cast %13 : vector<64xf32> to vector<1x1x64xf32>
    %15 = vector.broadcast %14 : vector<1x1x64xf32> to vector<8x8x64xf32>
    %16 = arith.mulf %11, %15 : vector<8x8x64xf32>
    %17 = arith.addf %10, %16 : vector<8x8x64xf32>
    %18 = vector.extract_strided_slice %5 {offsets = [0, 1, 0], sizes = [8, 8, 64], strides = [1, 1, 1]} : vector<10x10x64xf32> to vector<8x8x64xf32>
    %19 = vector.extract_strided_slice %6 {offsets = [0, 1, 0], sizes = [1, 1, 64], strides = [1, 1, 1]} : vector<3x3x64xf32> to vector<1x1x64xf32>
    %20 = vector.shape_cast %19 : vector<1x1x64xf32> to vector<64xf32>
    %21 = vector.shape_cast %20 : vector<64xf32> to vector<1x1x64xf32>
    %22 = vector.broadcast %21 : vector<1x1x64xf32> to vector<8x8x64xf32>
    %23 = arith.mulf %18, %22 : vector<8x8x64xf32>
    %24 = arith.addf %17, %23 : vector<8x8x64xf32>
    %25 = vector.extract_strided_slice %5 {offsets = [0, 2, 0], sizes = [8, 8, 64], strides = [1, 1, 1]} : vector<10x10x64xf32> to vector<8x8x64xf32>
    %26 = vector.extract_strided_slice %6 {offsets = [0, 2, 0], sizes = [1, 1, 64], strides = [1, 1, 1]} : vector<3x3x64xf32> to vector<1x1x64xf32>
    %27 = vector.shape_cast %26 : vector<1x1x64xf32> to vector<64xf32>
    %28 = vector.shape_cast %27 : vector<64xf32> to vector<1x1x64xf32>
    %29 = vector.broadcast %28 : vector<1x1x64xf32> to vector<8x8x64xf32>
    %30 = arith.mulf %25, %29 : vector<8x8x64xf32>
    %31 = arith.addf %24, %30 : vector<8x8x64xf32>
    %32 = vector.extract_strided_slice %5 {offsets = [1, 0, 0], sizes = [8, 8, 64], strides = [1, 1, 1]} : vector<10x10x64xf32> to vector<8x8x64xf32>
    %33 = vector.extract_strided_slice %6 {offsets = [1, 0, 0], sizes = [1, 1, 64], strides = [1, 1, 1]} : vector<3x3x64xf32> to vector<1x1x64xf32>
    %34 = vector.shape_cast %33 : vector<1x1x64xf32> to vector<64xf32>
    %35 = vector.shape_cast %34 : vector<64xf32> to vector<1x1x64xf32>
    %36 = vector.broadcast %35 : vector<1x1x64xf32> to vector<8x8x64xf32>
    %37 = arith.mulf %32, %36 : vector<8x8x64xf32>
    %38 = arith.addf %31, %37 : vector<8x8x64xf32>
    %39 = vector.extract_strided_slice %5 {offsets = [1, 1, 0], sizes = [8, 8, 64], strides = [1, 1, 1]} : vector<10x10x64xf32> to vector<8x8x64xf32>
    %40 = vector.extract_strided_slice %6 {offsets = [1, 1, 0], sizes = [1, 1, 64], strides = [1, 1, 1]} : vector<3x3x64xf32> to vector<1x1x64xf32>
    %41 = vector.shape_cast %40 : vector<1x1x64xf32> to vector<64xf32>
    %42 = vector.shape_cast %41 : vector<64xf32> to vector<1x1x64xf32>
    %43 = vector.broadcast %42 : vector<1x1x64xf32> to vector<8x8x64xf32>
    %44 = arith.mulf %39, %43 : vector<8x8x64xf32>
    %45 = arith.addf %38, %44 : vector<8x8x64xf32>
    %46 = vector.extract_strided_slice %5 {offsets = [1, 2, 0], sizes = [8, 8, 64], strides = [1, 1, 1]} : vector<10x10x64xf32> to vector<8x8x64xf32>
    %47 = vector.extract_strided_slice %6 {offsets = [1, 2, 0], sizes = [1, 1, 64], strides = [1, 1, 1]} : vector<3x3x64xf32> to vector<1x1x64xf32>
    %48 = vector.shape_cast %47 : vector<1x1x64xf32> to vector<64xf32>
    %49 = vector.shape_cast %48 : vector<64xf32> to vector<1x1x64xf32>
    %50 = vector.broadcast %49 : vector<1x1x64xf32> to vector<8x8x64xf32>
    %51 = arith.mulf %46, %50 : vector<8x8x64xf32>
    %52 = arith.addf %45, %51 : vector<8x8x64xf32>
    %53 = vector.extract_strided_slice %5 {offsets = [2, 0, 0], sizes = [8, 8, 64], strides = [1, 1, 1]} : vector<10x10x64xf32> to vector<8x8x64xf32>
    %54 = vector.extract_strided_slice %6 {offsets = [2, 0, 0], sizes = [1, 1, 64], strides = [1, 1, 1]} : vector<3x3x64xf32> to vector<1x1x64xf32>
    %55 = vector.shape_cast %54 : vector<1x1x64xf32> to vector<64xf32>
    %56 = vector.shape_cast %55 : vector<64xf32> to vector<1x1x64xf32>
    %57 = vector.broadcast %56 : vector<1x1x64xf32> to vector<8x8x64xf32>
    %58 = arith.mulf %53, %57 : vector<8x8x64xf32>
    %59 = arith.addf %52, %58 : vector<8x8x64xf32>
    %60 = vector.extract_strided_slice %5 {offsets = [2, 1, 0], sizes = [8, 8, 64], strides = [1, 1, 1]} : vector<10x10x64xf32> to vector<8x8x64xf32>
    %61 = vector.extract_strided_slice %6 {offsets = [2, 1, 0], sizes = [1, 1, 64], strides = [1, 1, 1]} : vector<3x3x64xf32> to vector<1x1x64xf32>
    %62 = vector.shape_cast %61 : vector<1x1x64xf32> to vector<64xf32>
    %63 = vector.shape_cast %62 : vector<64xf32> to vector<1x1x64xf32>
    %64 = vector.broadcast %63 : vector<1x1x64xf32> to vector<8x8x64xf32>
    %65 = arith.mulf %60, %64 : vector<8x8x64xf32>
    %66 = arith.addf %59, %65 : vector<8x8x64xf32>
    %67 = vector.extract_strided_slice %5 {offsets = [2, 2, 0], sizes = [8, 8, 64], strides = [1, 1, 1]} : vector<10x10x64xf32> to vector<8x8x64xf32>
    %68 = vector.extract_strided_slice %6 {offsets = [2, 2, 0], sizes = [1, 1, 64], strides = [1, 1, 1]} : vector<3x3x64xf32> to vector<1x1x64xf32>
    %69 = vector.shape_cast %68 : vector<1x1x64xf32> to vector<64xf32>
    %70 = vector.shape_cast %69 : vector<64xf32> to vector<1x1x64xf32>
    %71 = vector.broadcast %70 : vector<1x1x64xf32> to vector<8x8x64xf32>
    %72 = arith.mulf %67, %71 : vector<8x8x64xf32>
    %73 = arith.addf %66, %72 : vector<8x8x64xf32>
    %cst_16 = arith.constant 5.000000e-01 : f32
    %74 = vector.broadcast %cst_16 : f32 to vector<8x8x64xf32>
    %75 = arith.mulf %74, %73 : vector<8x8x64xf32>
    %cst_17 = arith.constant 4.471500e-02 : f32
    %76 = vector.broadcast %cst_17 : f32 to vector<8x8x64xf32>
    %77 = arith.mulf %76, %73 : vector<8x8x64xf32>
    %78 = arith.mulf %77, %73 : vector<8x8x64xf32>
    %79 = arith.mulf %78, %73 : vector<8x8x64xf32>
    %80 = arith.addf %73, %79 : vector<8x8x64xf32>
    %cst_18 = arith.constant 0.797884583 : f32
    %81 = vector.broadcast %cst_18 : f32 to vector<8x8x64xf32>
    %82 = arith.mulf %81, %80 : vector<8x8x64xf32>
    %83 = math.tanh %82 : vector<8x8x64xf32>
    %cst_19 = arith.constant 1.000000e+00 : f32
    %84 = vector.broadcast %cst_19 : f32 to vector<8x8x64xf32>
    %85 = arith.addf %84, %83 : vector<8x8x64xf32>
    %86 = arith.mulf %75, %85 : vector<8x8x64xf32>
    %c0_20 = arith.constant 0 : index
    %c0_21 = arith.constant 0 : index
    %c0_22 = arith.constant 0 : index
    %c0_23 = arith.constant 0 : index
    %87 = vector.load %arg5[%c0_20, %c0_21, %c0_22, %c0_23] : memref<1x8x8x64xf32, #tpu.memory_space<vmem>>, vector<1x8x8x64xf32>
    %88 = vector.shape_cast %87 : vector<1x8x8x64xf32> to vector<8x8x64xf32>
    %89 = vector.shape_cast %86 : vector<8x8x64xf32> to vector<1x8x8x64xf32>
    tpu.vector_store %arg5[%c0_20, %c0_21, %c0_22, %c0_23], %89 {strides = array<i32>} : memref<1x8x8x64xf32, #tpu.memory_space<vmem>>, vector<1x8x8x64xf32>,
    return
  }
  func.func @transform_0(%arg0: i32, %arg1: i32) -> (i32, i32, i32, i32) {
    %c0_i32 = arith.constant 0 : i32
    %c0_i32_0 = arith.constant 0 : i32
    %c0_i32_1 = arith.constant 0 : i32
    return %arg0, %c0_i32, %c0_i32_0, %arg1 : i32, i32, i32, i32
  }
  func.func @transform_1(%arg0: i32, %arg1: i32) -> (i32, i32, i32) {
    %c0_i32 = arith.constant 0 : i32
    %c0_i32_0 = arith.constant 0 : i32
    %c0_i32_1 = arith.constant 0 : i32
    return %c0_i32, %c0_i32_0, %arg1 : i32, i32, i32
  }
  func.func @transform_2(%arg0: i32, %arg1: i32) -> (i32, i32) {
    %c0_i32 = arith.constant 0 : i32
    %c0_i32_0 = arith.constant 0 : i32
    return %c0_i32, %arg1 : i32, i32
  }
  func.func @transform_3(%arg0: i32, %arg1: i32) -> (i32, i32, i32, i32) {
    %c0_i32 = arith.constant 0 : i32
    %c0_i32_0 = arith.constant 0 : i32
    %c0_i32_1 = arith.constant 0 : i32
    return %arg0, %c0_i32, %c0_i32_0, %arg1 : i32, i32, i32, i32
  }
}

module attributes {stable_mosaic.version = 11 : i64} {
  func.func @_matmul_bias_residual_kernel(%arg0: i32, %arg1: i32, %arg2: i32, %arg3: memref<128x64xf32, #tpu.memory_space<vmem>>, %arg4: memref<64x32xf32, #tpu.memory_space<vmem>>, %arg5: memref<1x32xf32, #tpu.memory_space<vmem>>, %arg6: memref<128x32xf32, #tpu.memory_space<vmem>>, %arg7: memref<128x32xf32, #tpu.memory_space<vmem>>, %arg8: memref<128x32xf32, #tpu.memory_space<vmem>>) attributes {dimension_semantics = [#tpu.dimension_semantics<parallel>, #tpu.dimension_semantics<parallel>, #tpu.dimension_semantics<arbitrary>], iteration_bounds = array<i64: 1, 1, 1>, scalar_prefetch = 0 : i64, scratch_operands = 1 : i64, tpu.core_type = #tpu.core_type<tc>, window_params = [{transform_indices = @transform_0, window_bounds = array<i64: 128, 64>}, {transform_indices = @transform_1, window_bounds = array<i64: 64, 32>}, {transform_indices = @transform_2, window_bounds = array<i64: 1, 32>}, {transform_indices = @transform_3, window_bounds = array<i64: 128, 32>}, {transform_indices = @transform_4, window_bounds = array<i64: 128, 32>}]} {
    %c0_i32 = arith.constant 0 : i32
    %0 = arith.cmpi eq, %arg2, %c0_i32 : i32
    %1 = arith.extui %0 : i1 to i32
    %c0_i32_0 = arith.constant 0 : i32
    %2 = arith.cmpi ne, %1, %c0_i32_0 : i32
    scf.if %2 {
      %cst_10 = arith.constant 0.000000e+00 : f32
      %12 = vector.broadcast %cst_10 : f32 to vector<128x32xf32>
      %c0_11 = arith.constant 0 : index
      %c0_12 = arith.constant 0 : index
      %13 = vector.load %arg8[%c0_11, %c0_12] : memref<128x32xf32, #tpu.memory_space<vmem>>, vector<128x32xf32>
      tpu.vector_store %arg8[%c0_11, %c0_12], %12 {strides = array<i32>} : memref<128x32xf32, #tpu.memory_space<vmem>>, vector<128x32xf32>,
    } else {
    }
    %c0 = arith.constant 0 : index
    %c0_1 = arith.constant 0 : index
    %3 = vector.load %arg8[%c0, %c0_1] : memref<128x32xf32, #tpu.memory_space<vmem>>, vector<128x32xf32>
    %c0_2 = arith.constant 0 : index
    %c0_3 = arith.constant 0 : index
    %4 = vector.load %arg3[%c0_2, %c0_3] : memref<128x64xf32, #tpu.memory_space<vmem>>, vector<128x64xf32>
    %c0_4 = arith.constant 0 : index
    %c0_5 = arith.constant 0 : index
    %5 = vector.load %arg4[%c0_4, %c0_5] : memref<64x32xf32, #tpu.memory_space<vmem>>, vector<64x32xf32>
    %cst = arith.constant dense<0.000000e+00> : vector<128x32xf32>
    %6 = tpu.matmul %4, %5, %cst {dimension_numbers = #tpu.dot_dimension_numbers<[1], [0], [0], [1], [0, 0, 1, 1], [], []>} : vector<128x64xf32>, vector<64x32xf32>, vector<128x32xf32> -> vector<128x32xf32>
    %7 = arith.addf %3, %6 : vector<128x32xf32>
    %c0_6 = arith.constant 0 : index
    %c0_7 = arith.constant 0 : index
    %8 = vector.load %arg8[%c0_6, %c0_7] : memref<128x32xf32, #tpu.memory_space<vmem>>, vector<128x32xf32>
    tpu.vector_store %arg8[%c0_6, %c0_7], %7 {strides = array<i32>} : memref<128x32xf32, #tpu.memory_space<vmem>>, vector<128x32xf32>,
    %c0_i32_8 = arith.constant 0 : i32
    %9 = arith.cmpi eq, %arg2, %c0_i32_8 : i32
    %10 = arith.extui %9 : i1 to i32
    %c0_i32_9 = arith.constant 0 : i32
    %11 = arith.cmpi ne, %10, %c0_i32_9 : i32
    scf.if %11 {
      %c0_10 = arith.constant 0 : index
      %c0_11 = arith.constant 0 : index
      %12 = vector.load %arg8[%c0_10, %c0_11] : memref<128x32xf32, #tpu.memory_space<vmem>>, vector<128x32xf32>
      %c0_12 = arith.constant 0 : index
      %c0_13 = arith.constant 0 : index
      %13 = vector.load %arg5[%c0_12, %c0_13] : memref<1x32xf32, #tpu.memory_space<vmem>>, vector<1x32xf32>
      %14 = vector.broadcast %13 : vector<1x32xf32> to vector<128x32xf32>
      %15 = arith.addf %12, %14 : vector<128x32xf32>
      %c0_14 = arith.constant 0 : index
      %c0_15 = arith.constant 0 : index
      %16 = vector.load %arg6[%c0_14, %c0_15] : memref<128x32xf32, #tpu.memory_space<vmem>>, vector<128x32xf32>
      %17 = arith.addf %15, %16 : vector<128x32xf32>
      %c0_16 = arith.constant 0 : index
      %c0_17 = arith.constant 0 : index
      %18 = vector.load %arg7[%c0_16, %c0_17] : memref<128x32xf32, #tpu.memory_space<vmem>>, vector<128x32xf32>
      tpu.vector_store %arg7[%c0_16, %c0_17], %17 {strides = array<i32>} : memref<128x32xf32, #tpu.memory_space<vmem>>, vector<128x32xf32>,
    } else {
    }
    return
  }
  func.func @transform_0(%arg0: i32, %arg1: i32, %arg2: i32) -> (i32, i32) {
    %c0_i32 = arith.constant 0 : i32
    return %arg0, %arg2 : i32, i32
  }
  func.func @transform_1(%arg0: i32, %arg1: i32, %arg2: i32) -> (i32, i32) {
    %c0_i32 = arith.constant 0 : i32
    return %arg2, %arg1 : i32, i32
  }
  func.func @transform_2(%arg0: i32, %arg1: i32, %arg2: i32) -> (i32, i32) {
    %c0_i32 = arith.constant 0 : i32
    %c0_i32_0 = arith.constant 0 : i32
    return %c0_i32, %arg1 : i32, i32
  }
  func.func @transform_3(%arg0: i32, %arg1: i32, %arg2: i32) -> (i32, i32) {
    %c0_i32 = arith.constant 0 : i32
    return %arg0, %arg1 : i32, i32
  }
  func.func @transform_4(%arg0: i32, %arg1: i32, %arg2: i32) -> (i32, i32) {
    %c0_i32 = arith.constant 0 : i32
    return %arg0, %arg1 : i32, i32
  }
}

</mosaic_0001>

<llo_original>
// kernel: mixffn_forward.3
$region0: #{mixffn_forward.3}
  #allocation0 [shape = 'u32[]', space=smem, size = 0x4, offset = 0x4, fixed_abs, tag = 'smem constant byte address 0x4 - core index']
  #allocation1 [shape = 'u32[72,128]{1,0:T(1,128)}', space=vmem, size = 0x9000, scoped, tag = 'internal scratch']
  #allocation2 [shape = 'f32[128,64]{1,0:T(8,128)}', space=vmem, size = 0x10000, scoped, tag = 'scratch operand']
  %s0 = inlined_call_operand.vmem [shape: f32[128,32], index: 0, kind: input, shape index: {}]
  %s1 = inlined_call_operand.vmem [shape: f32[32,64], index: 1, kind: input, shape index: {}]
  %s2 = inlined_call_operand.vmem [shape: f32[1,64], index: 2, kind: input, shape index: {}]
  %s3 = inlined_call_operand.vmem [shape: f32[128,64], index: 3, kind: output, shape index: {}]
  %s4 = sld [smem:[#allocation0]]
  $region30: #{mixffn_forward.3} parent=0
    _
  %s6 = ssub.s32 1, %s4
  %s7 = scalar_select 0, %s6, %s4
  // Predicated region
  $region2: #{mixffn_forward.3} parent=0 // pred_check
    _
  $region3: #{mixffn_forward.3} parent=0 // pred_check_branch
    %9 = sbr.rel (0) target = $region5
  $region4: #{mixffn_forward.3} parent=0 // pred_region
    _
  $region5: #{mixffn_forward.3} parent=0 // pred_fallthru
    _
  // Predicated region
  $region6: #{mixffn_forward.3} parent=0 // pred_check
    _
  $region7: #{mixffn_forward.3} parent=0 // pred_check_branch
    %11 = sbr.rel (0) target = $region9
  $region8: #{mixffn_forward.3} parent=0 // pred_region
    _
  $region9: #{mixffn_forward.3} parent=0 // pred_fallthru
    _
  // Predicated region
  $region10: #{mixffn_forward.3} parent=0 // pred_check
    _
  $region11: #{mixffn_forward.3} parent=0 // pred_check_branch
    %13 = sbr.rel (0) target = $region13
  $region12: #{mixffn_forward.3} parent=0 // pred_region
    _
  $region13: #{mixffn_forward.3} parent=0 // pred_fallthru
    _
  %p14 = scmp.eq.s32.totalorder 0, 0
  // Predicated region
  $region14: #{mixffn_forward.3} parent=0 // pred_check
    %p15 = pneg %p14
  $region15: #{mixffn_forward.3} parent=0 // pred_check_branch
    %17 = sbr.rel (%p15) target = $region17
  $region16: #{mixffn_forward.3} parent=0 // pred_region
    %vm18 = vcmask 523264
    %19 = vst.msk [vmem:[#allocation2] sm:$0xff] %vm18, 0.0
    %20 = vst.msk [vmem:[#allocation2 + $0x8] sm:$0xff] %vm18, 0.0
    %21 = vst.msk [vmem:[#allocation2 + $0x10] sm:$0xff] %vm18, 0.0
    %22 = vst.msk [vmem:[#allocation2 + $0x18] sm:$0xff] %vm18, 0.0
    %23 = vst.msk [vmem:[#allocation2 + $0x20] sm:$0xff] %vm18, 0.0
    %24 = vst.msk [vmem:[#allocation2 + $0x28] sm:$0xff] %vm18, 0.0
    %25 = vst.msk [vmem:[#allocation2 + $0x30] sm:$0xff] %vm18, 0.0
    %26 = vst.msk [vmem:[#allocation2 + $0x38] sm:$0xff] %vm18, 0.0
    %27 = vst.msk [vmem:[#allocation2 + $0x40] sm:$0xff] %vm18, 0.0
    %28 = vst.msk [vmem:[#allocation2 + $0x48] sm:$0xff] %vm18, 0.0
    %29 = vst.msk [vmem:[#allocation2 + $0x50] sm:$0xff] %vm18, 0.0
    %30 = vst.msk [vmem:[#allocation2 + $0x58] sm:$0xff] %vm18, 0.0
    %31 = vst.msk [vmem:[#allocation2 + $0x60] sm:$0xff] %vm18, 0.0
    %32 = vst.msk [vmem:[#allocation2 + $0x68] sm:$0xff] %vm18, 0.0
    %33 = vst.msk [vmem:[#allocation2 + $0x70] sm:$0xff] %vm18, 0.0
    %34 = vst.msk [vmem:[#allocation2 + $0x78] sm:$0xff] %vm18, 0.0
  $region17: #{mixffn_forward.3} parent=0 // pred_fallthru
    _
  %v35 = vld [vmem:[#allocation2] sm:$0xff]
  %v36 = vld [vmem:[#allocation2 + $0x8] sm:$0xff]
  %v37 = vld [vmem:[#allocation2 + $0x10] sm:$0xff]
  %v38 = vld [vmem:[#allocation2 + $0x18] sm:$0xff]
  %v39 = vld [vmem:[#allocation2 + $0x20] sm:$0xff]
  %v40 = vld [vmem:[#allocation2 + $0x28] sm:$0xff]
  %v41 = vld [vmem:[#allocation2 + $0x30] sm:$0xff]
  %v42 = vld [vmem:[#allocation2 + $0x38] sm:$0xff]
  %v43 = vld [vmem:[#allocation2 + $0x40] sm:$0xff]
  %v44 = vld [vmem:[#allocation2 + $0x48] sm:$0xff]
  %v45 = vld [vmem:[#allocation2 + $0x50] sm:$0xff]
  %v46 = vld [vmem:[#allocation2 + $0x58] sm:$0xff]
  %v47 = vld [vmem:[#allocation2 + $0x60] sm:$0xff]
  %v48 = vld [vmem:[#allocation2 + $0x68] sm:$0xff]
  %v49 = vld [vmem:[#allocation2 + $0x70] sm:$0xff]
  %v50 = vld [vmem:[#allocation2 + $0x78] sm:$0xff]
  %v51 = vld [vmem:[%s0] sm:$0xff]
  %v52 = vld [vmem:[%s0 + $0x8] sm:$0xff]
  %v53 = vld [vmem:[%s0 + $0x10] sm:$0xff]
  %v54 = vld [vmem:[%s0 + $0x18] sm:$0xff]
  %v55 = vld [vmem:[%s0 + $0x20] sm:$0xff]
  %v56 = vld [vmem:[%s0 + $0x28] sm:$0xff]
  %v57 = vld [vmem:[%s0 + $0x30] sm:$0xff]
  %v58 = vld [vmem:[%s0 + $0x38] sm:$0xff]
  %v59 = vld [vmem:[%s0 + $0x40] sm:$0xff]
  %v60 = vld [vmem:[%s0 + $0x48] sm:$0xff]
  %v61 = vld [vmem:[%s0 + $0x50] sm:$0xff]
  %v62 = vld [vmem:[%s0 + $0x58] sm:$0xff]
  %v63 = vld [vmem:[%s0 + $0x60] sm:$0xff]
  %v64 = vld [vmem:[%s0 + $0x68] sm:$0xff]
  %v65 = vld [vmem:[%s0 + $0x70] sm:$0xff]
  %v66 = vld [vmem:[%s0 + $0x78] sm:$0xff]
  %v67 = vld [vmem:[%s1] sm:$0xff]
  %v68 = vld [vmem:[%s1 + $0x8] sm:$0xff]
  %v69 = vld [vmem:[%s1 + $0x10] sm:$0xff]
  %v70 = vld [vmem:[%s1 + $0x18] sm:$0xff]
  %vm71 = vcmask 261120
  %v73 = vsel %vm71, %v51, 0
  %v76 = vsel %vm71, %v52, 0
  %v79 = vsel %vm71, %v53, 0
  %v82 = vsel %vm71, %v54, 0
  %v85 = vsel %vm71, %v55, 0
  %v88 = vsel %vm71, %v56, 0
  %v91 = vsel %vm71, %v57, 0
  %v94 = vsel %vm71, %v58, 0
  %v97 = vsel %vm71, %v59, 0
  %v100 = vsel %vm71, %v60, 0
  %v103 = vsel %vm71, %v61, 0
  %v106 = vsel %vm71, %v62, 0
  %v109 = vsel %vm71, %v63, 0
  %v112 = vsel %vm71, %v64, 0
  %v115 = vsel %vm71, %v65, 0
  %v118 = vsel %vm71, %v66, 0
  %120 = vmatpush.msra.mxu0 0.0
  %121 = vmatpush.msra.mxu0 0.0
  %122 = vmatpush.msra.mxu0 0.0
  %123 = vmatpush.msra.mxu0 0.0
  %124 = vmatpush.msra.mxu0 0.0
  %125 = vmatpush.msra.mxu0 0.0
  %126 = vmatpush.msra.mxu0 0.0
  %127 = vmatpush.msra.mxu0 0.0
  %128 = vmatpush.msra.mxu0 0.0
  %129 = vmatpush.msra.mxu0 0.0
  %130 = vmatpush.msra.mxu0 0.0
  %131 = vmatpush.msra.mxu0 0.0
  %132 = vmatpush.msra.mxu0 %v70
  %133 = vmatpush.msra.mxu0 %v69
  %134 = vmatpush.msra.mxu0 %v68
  %135 = vmatpush.msra.mxu0 %v67
  %136 = vmatmul.f32.gmra.mxu0 %v73
  %v137 = vpop.f32.mrf.mxu0
  %v138 = vadd.f32 0.0, %v137
  %139 = vmatmul.f32.gmra.mxu0 %v76
  %v140 = vpop.f32.mrf.mxu0
  %v141 = vadd.f32 0.0, %v140
  %142 = vmatmul.f32.gmra.mxu0 %v79
  %v143 = vpop.f32.mrf.mxu0
  %v144 = vadd.f32 0.0, %v143
  %145 = vmatmul.f32.gmra.mxu0 %v82
  %v146 = vpop.f32.mrf.mxu0
  %v147 = vadd.f32 0.0, %v146
  %148 = vmatmul.f32.gmra.mxu0 %v85
  %v149 = vpop.f32.mrf.mxu0
  %v150 = vadd.f32 0.0, %v149
  %151 = vmatmul.f32.gmra.mxu0 %v88
  %v152 = vpop.f32.mrf.mxu0
  %v153 = vadd.f32 0.0, %v152
  %154 = vmatmul.f32.gmra.mxu0 %v91
  %v155 = vpop.f32.mrf.mxu0
  %v156 = vadd.f32 0.0, %v155
  %157 = vmatmul.f32.gmra.mxu0 %v94
  %v158 = vpop.f32.mrf.mxu0
  %v159 = vadd.f32 0.0, %v158
  %160 = vmatmul.f32.gmra.mxu0 %v97
  %v161 = vpop.f32.mrf.mxu0
  %v162 = vadd.f32 0.0, %v161
  %163 = vmatmul.f32.gmra.mxu0 %v100
  %v164 = vpop.f32.mrf.mxu0
  %v165 = vadd.f32 0.0, %v164
  %166 = vmatmul.f32.gmra.mxu0 %v103
  %v167 = vpop.f32.mrf.mxu0
  %v168 = vadd.f32 0.0, %v167
  %169 = vmatmul.f32.gmra.mxu0 %v106
  %v170 = vpop.f32.mrf.mxu0
  %v171 = vadd.f32 0.0, %v170
  %172 = vmatmul.f32.gmra.mxu0 %v109
  %v173 = vpop.f32.mrf.mxu0
  %v174 = vadd.f32 0.0, %v173
  %175 = vmatmul.f32.gmra.mxu0 %v112
  %v176 = vpop.f32.mrf.mxu0
  %v177 = vadd.f32 0.0, %v176
  %178 = vmatmul.f32.gmra.mxu0 %v115
  %v179 = vpop.f32.mrf.mxu0
  %v180 = vadd.f32 0.0, %v179
  %181 = vmatmul.f32.gmra.mxu0 %v118
  %v182 = vpop.f32.mrf.mxu0
  %v183 = vadd.f32 0.0, %v182
  %184 = vdwg.mxu0
  %v185 = vadd.f32 %v35, %v138
  %v186 = vadd.f32 %v36, %v141
  %v187 = vadd.f32 %v37, %v144
  %v188 = vadd.f32 %v38, %v147
  %v189 = vadd.f32 %v39, %v150
  %v190 = vadd.f32 %v40, %v153
  %v191 = vadd.f32 %v41, %v156
  %v192 = vadd.f32 %v42, %v159
  %v193 = vadd.f32 %v43, %v162
  %v194 = vadd.f32 %v44, %v165
  %v195 = vadd.f32 %v45, %v168
  %v196 = vadd.f32 %v46, %v171
  %v197 = vadd.f32 %v47, %v174
  %v198 = vadd.f32 %v48, %v177
  %v199 = vadd.f32 %v49, %v180
  %v200 = vadd.f32 %v50, %v183
  %vm201 = vcmask 523264
  %202 = vst.msk [vmem:[#allocation2] sm:$0xff] %vm201, %v185
  %203 = vst.msk [vmem:[#allocation2 + $0x8] sm:$0xff] %vm201, %v186
  %204 = vst.msk [vmem:[#allocation2 + $0x10] sm:$0xff] %vm201, %v187
  %205 = vst.msk [vmem:[#allocation2 + $0x18] sm:$0xff] %vm201, %v188
  %206 = vst.msk [vmem:[#allocation2 + $0x20] sm:$0xff] %vm201, %v189
  %207 = vst.msk [vmem:[#allocation2 + $0x28] sm:$0xff] %vm201, %v190
  %208 = vst.msk [vmem:[#allocation2 + $0x30] sm:$0xff] %vm201, %v191
  %209 = vst.msk [vmem:[#allocation2 + $0x38] sm:$0xff] %vm201, %v192
  %210 = vst.msk [vmem:[#allocation2 + $0x40] sm:$0xff] %vm201, %v193
  %211 = vst.msk [vmem:[#allocation2 + $0x48] sm:$0xff] %vm201, %v194
  %212 = vst.msk [vmem:[#allocation2 + $0x50] sm:$0xff] %vm201, %v195
  %213 = vst.msk [vmem:[#allocation2 + $0x58] sm:$0xff] %vm201, %v196
  %214 = vst.msk [vmem:[#allocation2 + $0x60] sm:$0xff] %vm201, %v197
  %215 = vst.msk [vmem:[#allocation2 + $0x68] sm:$0xff] %vm201, %v198
  %216 = vst.msk [vmem:[#allocation2 + $0x70] sm:$0xff] %vm201, %v199
  %217 = vst.msk [vmem:[#allocation2 + $0x78] sm:$0xff] %vm201, %v200
  // Predicated region
  $region18: #{mixffn_forward.3} parent=0 // pred_check
    %p218 = pneg %p14
  $region19: #{mixffn_forward.3} parent=0 // pred_check_branch
    %220 = sbr.rel (%p218) target = $region21
  $region20: #{mixffn_forward.3} parent=0 // pred_region
    %v221 = vld [vmem:[#allocation2] sm:$0xff]
    %v222 = vld [vmem:[#allocation2 + $0x8] sm:$0xff]
    %v223 = vld [vmem:[#allocation2 + $0x10] sm:$0xff]
    %v224 = vld [vmem:[#allocation2 + $0x18] sm:$0xff]
    %v225 = vld [vmem:[#allocation2 + $0x20] sm:$0xff]
    %v226 = vld [vmem:[#allocation2 + $0x28] sm:$0xff]
    %v227 = vld [vmem:[#allocation2 + $0x30] sm:$0xff]
    %v228 = vld [vmem:[#allocation2 + $0x38] sm:$0xff]
    %v229 = vld [vmem:[#allocation2 + $0x40] sm:$0xff]
    %v230 = vld [vmem:[#allocation2 + $0x48] sm:$0xff]
    %v231 = vld [vmem:[#allocation2 + $0x50] sm:$0xff]
    %v232 = vld [vmem:[#allocation2 + $0x58] sm:$0xff]
    %v233 = vld [vmem:[#allocation2 + $0x60] sm:$0xff]
    %v234 = vld [vmem:[#allocation2 + $0x68] sm:$0xff]
    %v235 = vld [vmem:[#allocation2 + $0x70] sm:$0xff]
    %v236 = vld [vmem:[#allocation2 + $0x78] sm:$0xff]
    %v237 = vld [vmem:[%s2] sm:$0x1]
    %v239 = vperm.slane %v237, 0
    %v241 = vadd.f32 %v221, %v239
    %v242 = vadd.f32 %v222, %v239
    %v243 = vadd.f32 %v223, %v239
    %v244 = vadd.f32 %v224, %v239
    %v245 = vadd.f32 %v225, %v239
    %v246 = vadd.f32 %v226, %v239
    %v247 = vadd.f32 %v227, %v239
    %v248 = vadd.f32 %v228, %v239
    %v249 = vadd.f32 %v229, %v239
    %v250 = vadd.f32 %v230, %v239
    %v251 = vadd.f32 %v231, %v239
    %v252 = vadd.f32 %v232, %v239
    %v253 = vadd.f32 %v233, %v239
    %v254 = vadd.f32 %v234, %v239
    %v255 = vadd.f32 %v235, %v239
    %v256 = vadd.f32 %v236, %v239
    %257 = vst.msk [vmem:[%s3] sm:$0xff] %vm201, %v241
    %258 = vst.msk [vmem:[%s3 + $0x8] sm:$0xff] %vm201, %v242
    %259 = vst.msk [vmem:[%s3 + $0x10] sm:$0xff] %vm201, %v243
    %260 = vst.msk [vmem:[%s3 + $0x18] sm:$0xff] %vm201, %v244
    %261 = vst.msk [vmem:[%s3 + $0x20] sm:$0xff] %vm201, %v245
    %262 = vst.msk [vmem:[%s3 + $0x28] sm:$0xff] %vm201, %v246
    %263 = vst.msk [vmem:[%s3 + $0x30] sm:$0xff] %vm201, %v247
    %264 = vst.msk [vmem:[%s3 + $0x38] sm:$0xff] %vm201, %v248
    %265 = vst.msk [vmem:[%s3 + $0x40] sm:$0xff] %vm201, %v249
    %266 = vst.msk [vmem:[%s3 + $0x48] sm:$0xff] %vm201, %v250
    %267 = vst.msk [vmem:[%s3 + $0x50] sm:$0xff] %vm201, %v251
    %268 = vst.msk [vmem:[%s3 + $0x58] sm:$0xff] %vm201, %v252
    %269 = vst.msk [vmem:[%s3 + $0x60] sm:$0xff] %vm201, %v253
    %270 = vst.msk [vmem:[%s3 + $0x68] sm:$0xff] %vm201, %v254
    %271 = vst.msk [vmem:[%s3 + $0x70] sm:$0xff] %vm201, %v255
    %272 = vst.msk [vmem:[%s3 + $0x78] sm:$0xff] %vm201, %v256
  $region21: #{mixffn_forward.3} parent=0 // pred_fallthru
    _
  // Predicated region
  $region22: #{mixffn_forward.3} parent=0 // pred_check
    _
  $region23: #{mixffn_forward.3} parent=0 // pred_check_branch
    %274 = sbr.rel (0) target = $region25
  $region24: #{mixffn_forward.3} parent=0 // pred_region
    _
  $region25: #{mixffn_forward.3} parent=0 // pred_fallthru
    _
  // Predicated region
  $region26: #{mixffn_forward.3} parent=0 // pred_check
    _
  $region27: #{mixffn_forward.3} parent=0 // pred_check_branch
    %276 = sbr.rel (0) target = $region29
  $region28: #{mixffn_forward.3} parent=0 // pred_region
    _
  $region29: #{mixffn_forward.3} parent=0 // pred_fallthru
    _

// kernel: mixffn_forward.4
$region0: #{mixffn_forward.4}
  #allocation0 [shape = 'u32[]', space=smem, size = 0x4, offset = 0x4, fixed_abs, tag = 'smem constant byte address 0x4 - core index']
  #allocation1 [shape = 'u32[72,128]{1,0:T(1,128)}', space=vmem, size = 0x9000, scoped, tag = 'internal scratch']
  #allocation2 [shape = 'f32[10,10,64]{2,1,0:T(8,128)}', space=vmem, size = 0x14000, scoped, tag = 'scratch operand']
  %s0 = inlined_call_operand.vmem [shape: f32[2,8,8,64], index: 0, kind: input, shape index: {}]
  %s1 = inlined_call_operand.vmem [shape: f32[3,3,64], index: 1, kind: input, shape index: {}]
  %s2 = inlined_call_operand.vmem [shape: f32[1,64], index: 2, kind: input, shape index: {}]
  %s3 = inlined_call_operand.vmem [shape: f32[2,8,8,64], index: 3, kind: output, shape index: {}]
  %s4 = sld [smem:[#allocation0]]
  $region45: #{mixffn_forward.4} parent=0
    _
  %s6 = ssub.s32 1, %s4
  %s7 = scalar_select 0, %s6, %s4
  loop: start=0, step=1, limit=4
  $region2: #{mixffn_forward.4} parent=0 // loop_pre_header
    _
  $region3: #{mixffn_forward.4} parent=0 // loop_header
    %s9 = sphi 0, %s13
    %p10 = scmp.ge.s32.totalorder %s9, 4
    %s16 = sphi 0, %s28
    %s17 = sphi 0, %s24
    %s18 = sphi 0, %s16
    %s19 = sphi 0, %s17
    %s20 = sphi 0, %s18
    %s21 = sphi 0, %s19
    %s33 = sphi 0, %s35
    %s36 = sphi 0, %s33
    %s37 = sphi 0, %s36
    %s53 = sphi 0, %s37
    %s59 = sphi 0, %s61
    %s62 = sphi 0, %s59
    %s63 = sphi 0, %s62
    %s79 = sphi 0, %s63
    %s85 = sphi 0, %s87
    %s88 = sphi 0, %s85
    %s89 = sphi 0, %s88
    %s105 = sphi 0, %s89
    %s113 = sphi 0, %s115
    %s116 = sphi 0, %s113
    %s117 = sphi 0, %s116
    %s133 = sphi 0, %s117
  $region4: #{mixffn_forward.4} parent=0 // loop_header_branch
    %12 = sbr.rel (%p10) target = $region8
  $region5: #{mixffn_forward.4} parent=0 // loop_body
    %s14 = ssub.s32 %s9, 1
    %s15 = ssub.s32 %s9, 2
    %s22 = sadd.s32 1, %s17
    %p23 = scmp.ge.s32.totalorder %s22, 1
    %s24 = scalar_select %p23, 0, %s22
    %s25 = sadd.s32 1, %s16
    %s26 = scalar_select %p23, %s25, %s16
    %p27 = scmp.ge.s32.totalorder %s26, 2
    %s28 = scalar_select %p27, 0, %s26
    %s29 = ssub.s32 %s16, %s28
    %s30 = ssub.s32 %s17, %s24
    %s31 = sor.u32 %s29, %s30
    %p32 = scmp.eq.s32.totalorder %s31, 0
    %s34 = sadd.s32 %s33, 1
    %s35 = scalar_select %p32, %s33, %s34
    %p38 = pneg %p32
    %p39 = scmp.eq.s32.totalorder %s9, 1
    %p40 = por %p38, %p39
    %p41 = scmp.ne.s32.totalorder %s33, %s36
    %p42 = scmp.eq.s32.totalorder %s9, 0
    %p43 = por %p41, %p42
    %p44 = scmp.ne.s32.totalorder %s33, %s36
    %p45 = scmp.eq.s32.totalorder %s14, 1
    %p46 = por %p44, %p45
    %p47 = scmp.ne.s32.totalorder %s36, %s37
    %p48 = scmp.eq.s32.totalorder %s14, 0
    %p49 = por %p47, %p48
    %p50 = scmp.ne.s32.totalorder %s36, %s37
    %p51 = scmp.eq.s32.totalorder %s15, 1
    %p52 = por %p50, %p51
    %p54 = scmp.ne.s32.totalorder %s37, %s53
    %p55 = scmp.eq.s32.totalorder %s15, 0
    %p56 = por %p54, %p55
    %s57 = ssub.s32 %s17, %s24
    %p58 = scmp.eq.s32.totalorder %s57, 0
    %s60 = sadd.s32 %s59, 1
    %s61 = scalar_select %p58, %s59, %s60
    %p64 = pneg %p58
    %p65 = scmp.eq.s32.totalorder %s9, 1
    %p66 = por %p64, %p65
    %p67 = scmp.ne.s32.totalorder %s59, %s62
    %p68 = scmp.eq.s32.totalorder %s9, 0
    %p69 = por %p67, %p68
    %p70 = scmp.ne.s32.totalorder %s59, %s62
    %p71 = scmp.eq.s32.totalorder %s14, 1
    %p72 = por %p70, %p71
    %p73 = scmp.ne.s32.totalorder %s62, %s63
    %p74 = scmp.eq.s32.totalorder %s14, 0
    %p75 = por %p73, %p74
    %p76 = scmp.ne.s32.totalorder %s62, %s63
    %p77 = scmp.eq.s32.totalorder %s15, 1
    %p78 = por %p76, %p77
    %p80 = scmp.ne.s32.totalorder %s63, %s79
    %p81 = scmp.eq.s32.totalorder %s15, 0
    %p82 = por %p80, %p81
    %s83 = ssub.s32 %s17, %s24
    %p84 = scmp.eq.s32.totalorder %s83, 0
    %s86 = sadd.s32 %s85, 1
    %s87 = scalar_select %p84, %s85, %s86
    %p90 = pneg %p84
    %p91 = scmp.eq.s32.totalorder %s9, 1
    %p92 = por %p90, %p91
    %p93 = scmp.ne.s32.totalorder %s85, %s88
    %p94 = scmp.eq.s32.totalorder %s9, 0
    %p95 = por %p93, %p94
    %p96 = scmp.ne.s32.totalorder %s85, %s88
    %p97 = scmp.eq.s32.totalorder %s14, 1
    %p98 = por %p96, %p97
    %p99 = scmp.ne.s32.totalorder %s88, %s89
    %p100 = scmp.eq.s32.totalorder %s14, 0
    %p101 = por %p99, %p100
    %p102 = scmp.ne.s32.totalorder %s88, %s89
    %p103 = scmp.eq.s32.totalorder %s15, 1
    %p104 = por %p102, %p103
    %p106 = scmp.ne.s32.totalorder %s89, %s105
    %p107 = scmp.eq.s32.totalorder %s15, 0
    %p108 = por %p106, %p107
    %s109 = ssub.s32 %s16, %s28
    %s110 = ssub.s32 %s17, %s24
    %s111 = sor.u32 %s109, %s110
    %p112 = scmp.eq.s32.totalorder %s111, 0
    %s114 = sadd.s32 %s113, 1
    %s115 = scalar_select %p112, %s113, %s114
    %p118 = pneg %p112
    %p119 = scmp.eq.s32.totalorder %s9, 1
    %p120 = por %p118, %p119
    %p121 = scmp.ne.s32.totalorder %s113, %s116
    %p122 = scmp.eq.s32.totalorder %s9, 0
    %p123 = por %p121, %p122
    %p124 = scmp.ne.s32.totalorder %s113, %s116
    %p125 = scmp.eq.s32.totalorder %s14, 1
    %p126 = por %p124, %p125
    %p127 = scmp.ne.s32.totalorder %s116, %s117
    %p128 = scmp.eq.s32.totalorder %s14, 0
    %p129 = por %p127, %p128
    %p130 = scmp.ne.s32.totalorder %s116, %s117
    %p131 = scmp.eq.s32.totalorder %s15, 1
    %p132 = por %p130, %p131
    %p134 = scmp.ne.s32.totalorder %s117, %s133
    %p135 = scmp.eq.s32.totalorder %s15, 0
    %p136 = por %p134, %p135
    %p137 = scmp.le.s32.totalorder 1, %s9
    %p138 = scmp.lt.s32.totalorder %s9, 3
    %p139 = pnand %p137, %p138
    %p140 = pneg %p139
    // Predicated region
    $region9: #{mixffn_forward.4} parent=5 // pred_check
      _
    $region10: #{mixffn_forward.4} parent=5 // pred_check_branch
      %142 = sbr.rel (%p139) target = $region12
    $region11: #{mixffn_forward.4} parent=5 // pred_region
      %s143 = ssub.s32 %s9, 1
      // Predicated region
      $region13: #{mixffn_forward.4} parent=11 // pred_check
        %p144 = pneg %p75
      $region14: #{mixffn_forward.4} parent=11 // pred_check_branch
        %146 = sbr.rel (%p144) target = $region16
      $region15: #{mixffn_forward.4} parent=11 // pred_region
        %p147 = scmp.lt.s32.totalorder %s19, 0
        %s148 = scalar_select %p147, %s19, 0
        %s149 = smul.addr %s148, 4
        %s150 = scalar_lea.vmem %s1, %s149
      $region16: #{mixffn_forward.4} parent=11 // pred_fallthru
        _
      // Predicated region
      $region17: #{mixffn_forward.4} parent=11 // pred_check
        %p151 = pneg %p101
      $region18: #{mixffn_forward.4} parent=11 // pred_check_branch
        %153 = sbr.rel (%p151) target = $region20
      $region19: #{mixffn_forward.4} parent=11 // pred_region
        %p154 = scmp.lt.s32.totalorder %s19, 0
        %s155 = scalar_select %p154, %s19, 0
        %s156 = scalar_lea.vmem %s2, %s155
      $region20: #{mixffn_forward.4} parent=11 // pred_fallthru
        _
    $region12: #{mixffn_forward.4} parent=5 // pred_fallthru
      _
    %p157 = scmp.lt.s32.totalorder %s9, 2
    // Predicated region
    $region21: #{mixffn_forward.4} parent=5 // pred_check
      %p158 = pneg %p157
    $region22: #{mixffn_forward.4} parent=5 // pred_check_branch
      %160 = sbr.rel (%p158) target = $region24
    $region23: #{mixffn_forward.4} parent=5 // pred_region
      // Predicated region
      $region25: #{mixffn_forward.4} parent=23 // pred_check
        %p161 = pneg %p43
      $region26: #{mixffn_forward.4} parent=23 // pred_check_branch
        %163 = sbr.rel (%p161) target = $region28
      $region27: #{mixffn_forward.4} parent=23 // pred_region
        %p164 = scmp.lt.s32.totalorder %s16, 1
        %s165 = scalar_select %p164, %s16, 1
        %p166 = scmp.lt.s32.totalorder %s17, 0
        %s167 = scalar_select %p166, %s17, 0
        %s168 = smul.addr %s165, 8
        %s169 = sadd.s32 %s167, %s168
        %s170 = smul.addr %s169, 8
        %s171 = scalar_lea.vmem %s0, %s170
      $region28: #{mixffn_forward.4} parent=23 // pred_fallthru
        _
    $region24: #{mixffn_forward.4} parent=5 // pred_fallthru
      _
    %p172 = scmp.le.s32.totalorder 1, %s9
    %p173 = scmp.lt.s32.totalorder %s9, 3
    %p174 = pnand %p172, %p173
    %p175 = pneg %p174
    // Predicated region
    $region29: #{mixffn_forward.4} parent=5 // pred_check
      _
    $region30: #{mixffn_forward.4} parent=5 // pred_check_branch
      %177 = sbr.rel (%p174) target = $region32
    $region31: #{mixffn_forward.4} parent=5 // pred_region
      %s178 = ssub.s32 %s9, 1
      %p179 = scmp.lt.s32.totalorder %s18, 1
      %s180 = scalar_select %p179, %s18, 1
      %p181 = scmp.lt.s32.totalorder %s19, 0
      %s182 = scalar_select %p181, %s19, 0
      %s183 = smul.addr %s180, 8
      %s184 = sadd.s32 %s182, %s183
      %s185 = smul.addr %s184, 8
      %s186 = scalar_lea.vmem %s0, %s185
      %p187 = pneg %p49
      %p188 = pneg %p46
      %p189 = scmp.lt.s32.totalorder %s19, 0
      %s190 = scalar_select %p189, %s19, 0
      %s191 = smul.addr %s190, 4
      %s192 = scalar_lea.vmem %s1, %s191
      %p193 = pneg %p75
      %p194 = pneg %p72
      %p195 = scmp.lt.s32.totalorder %s19, 0
      %s196 = scalar_select %p195, %s19, 0
      %s197 = scalar_lea.vmem %s2, %s196
      %p198 = pneg %p101
      %p199 = pneg %p98
      %p200 = pneg %p129
      %p201 = pneg %p126
      %p202 = scmp.lt.s32.totalorder %s18, 1
      %s203 = scalar_select %p202, %s18, 1
      %p204 = scmp.lt.s32.totalorder %s19, 0
      %s205 = scalar_select %p204, %s19, 0
      %s206 = smul.addr %s203, 8
      %s207 = sadd.s32 %s205, %s206
      %s208 = smul.addr %s207, 8
      %s209 = scalar_lea.vmem %s3, %s208
      %p210 = scmp.lt.s32.totalorder %s18, 1
      %s211 = scalar_select %p210, %s18, 1
      %p212 = scmp.lt.s32.totalorder %s19, 0
      %s213 = scalar_select %p212, %s19, 0
      %s214 = smul.addr %s211, 8
      %s215 = sadd.s32 %s213, %s214
      %s216 = smul.addr %s215, 8
      %s217 = scalar_lea.vmem %s0, %s216
      %p218 = scmp.lt.s32.totalorder %s19, 0
      %s219 = scalar_select %p218, %s19, 0
      %s220 = smul.addr %s219, 4
      %s221 = scalar_lea.vmem %s1, %s220
      %p222 = scmp.lt.s32.totalorder %s19, 0
      %s223 = scalar_select %p222, %s19, 0
      %s224 = scalar_lea.vmem %s2, %s223
      %p225 = scmp.lt.s32.totalorder %s18, 1
      %s226 = scalar_select %p225, %s18, 1
      %p227 = scmp.lt.s32.totalorder %s19, 0
      %s228 = scalar_select %p227, %s19, 0
      %s229 = smul.addr %s226, 8
      %s230 = sadd.s32 %s228, %s229
      %s231 = smul.addr %s230, 8
      %s232 = scalar_lea.vmem %s3, %s231
      %vm233 = vcmask 523264
      %234 = vst.msk [vmem:[#allocation2] sm:$0xff] %vm233, 0.0
      %vm235 = vcmask 517120
      %236 = vst.msk [vmem:[#allocation2 + $0x8] sm:$0x3] %vm235, 0.0
      %237 = vst.msk [vmem:[#allocation2 + $0x10] sm:$0xff] %vm233, 0.0
      %238 = vst.msk [vmem:[#allocation2 + $0x18] sm:$0x3] %vm235, 0.0
      %239 = vst.msk [vmem:[#allocation2 + $0x20] sm:$0xff] %vm233, 0.0
      %240 = vst.msk [vmem:[#allocation2 + $0x28] sm:$0x3] %vm235, 0.0
      %241 = vst.msk [vmem:[#allocation2 + $0x30] sm:$0xff] %vm233, 0.0
      %242 = vst.msk [vmem:[#allocation2 + $0x38] sm:$0x3] %vm235, 0.0
      %243 = vst.msk [vmem:[#allocation2 + $0x40] sm:$0xff] %vm233, 0.0
      %244 = vst.msk [vmem:[#allocation2 + $0x48] sm:$0x3] %vm235, 0.0
      %245 = vst.msk [vmem:[#allocation2 + $0x50] sm:$0xff] %vm233, 0.0
      %246 = vst.msk [vmem:[#allocation2 + $0x58] sm:$0x3] %vm235, 0.0
      %247 = vst.msk [vmem:[#allocation2 + $0x60] sm:$0xff] %vm233, 0.0
      %248 = vst.msk [vmem:[#allocation2 + $0x68] sm:$0x3] %vm235, 0.0
      %249 = vst.msk [vmem:[#allocation2 + $0x70] sm:$0xff] %vm233, 0.0
      %250 = vst.msk [vmem:[#allocation2 + $0x78] sm:$0x3] %vm235, 0.0
      %251 = vst.msk [vmem:[#allocation2 + $0x80] sm:$0xff] %vm233, 0.0
      %252 = vst.msk [vmem:[#allocation2 + $0x88] sm:$0x3] %vm235, 0.0
      %253 = vst.msk [vmem:[#allocation2 + $0x90] sm:$0xff] %vm233, 0.0
      %254 = vst.msk [vmem:[#allocation2 + $0x98] sm:$0x3] %vm235, 0.0
      %v255 = vld [vmem:[%s217] sm:$0xff]
      %v256 = vld [vmem:[%s217 + $0x8] sm:$0xff]
      %v257 = vld [vmem:[%s217 + $0x10] sm:$0xff]
      %v258 = vld [vmem:[%s217 + $0x18] sm:$0xff]
      %v259 = vld [vmem:[%s217 + $0x20] sm:$0xff]
      %v260 = vld [vmem:[%s217 + $0x28] sm:$0xff]
      %v261 = vld [vmem:[%s217 + $0x30] sm:$0xff]
      %v262 = vld [vmem:[%s217 + $0x38] sm:$0xff]
      %s263 = scalar_lea.vmem [#allocation2], 16
      %264 = vst.msk [vmem:[%s263 + $0x1] sm:$0xff] %vm233, %v255
      %265 = vst.msk [vmem:[%s263 + $0x11] sm:$0xff] %vm233, %v256
      %266 = vst.msk [vmem:[%s263 + $0x21] sm:$0xff] %vm233, %v257
      %267 = vst.msk [vmem:[%s263 + $0x31] sm:$0xff] %vm233, %v258
      %268 = vst.msk [vmem:[%s263 + $0x41] sm:$0xff] %vm233, %v259
      %269 = vst.msk [vmem:[%s263 + $0x51] sm:$0xff] %vm233, %v260
      %270 = vst.msk [vmem:[%s263 + $0x61] sm:$0xff] %vm233, %v261
      %271 = vst.msk [vmem:[%s263 + $0x71] sm:$0xff] %vm233, %v262
      %v272 = vld [vmem:[#allocation2] sm:$0xff]
      %v273 = vld [vmem:[#allocation2 + $0x8] sm:$0x3]
      %v274 = vld [vmem:[#allocation2 + $0x10] sm:$0xff]
      %v275 = vld [vmem:[#allocation2 + $0x18] sm:$0x3]
      %v276 = vld [vmem:[#allocation2 + $0x20] sm:$0xff]
      %v277 = vld [vmem:[#allocation2 + $0x28] sm:$0x3]
      %v278 = vld [vmem:[#allocation2 + $0x30] sm:$0xff]
      %v279 = vld [vmem:[#allocation2 + $0x38] sm:$0x3]
      %v280 = vld [vmem:[#allocation2 + $0x40] sm:$0xff]
      %v281 = vld [vmem:[#allocation2 + $0x48] sm:$0x3]
      %v282 = vld [vmem:[#allocation2 + $0x50] sm:$0xff]
      %v283 = vld [vmem:[#allocation2 + $0x58] sm:$0x3]
      %v284 = vld [vmem:[#allocation2 + $0x60] sm:$0xff]
      %v285 = vld [vmem:[#allocation2 + $0x68] sm:$0x3]
      %v286 = vld [vmem:[#allocation2 + $0x70] sm:$0xff]
      %v287 = vld [vmem:[#allocation2 + $0x78] sm:$0x3]
      %v288 = vld [vmem:[#allocation2 + $0x80] sm:$0xff]
      %v289 = vld [vmem:[#allocation2 + $0x88] sm:$0x3]
      %v290 = vld [vmem:[#allocation2 + $0x90] sm:$0xff]
      %v291 = vld [vmem:[#allocation2 + $0x98] sm:$0x3]
      %v292 = vld [vmem:[%s221] sm:$0x7]
      %v293 = vld [vmem:[%s221 + $0x4] sm:$0x7]
      %v294 = vld [vmem:[%s221 + $0x8] sm:$0x7]
      %v295 = vld [vmem:[%s224] sm:$0x1]
      %v297 = vperm.slane %v295, 0
      %v299 = vperm.slane %v292, 0
      %v300 = vmul.f32 %v272, %v299
      %v301 = vmul.f32 %v274, %v299
      %v302 = vmul.f32 %v276, %v299
      %v303 = vmul.f32 %v278, %v299
      %v304 = vmul.f32 %v280, %v299
      %v305 = vmul.f32 %v282, %v299
      %v306 = vmul.f32 %v284, %v299
      %v307 = vmul.f32 %v286, %v299
      %v308 = vadd.f32 %v297, %v300
      %v309 = vadd.f32 %v297, %v301
      %v310 = vadd.f32 %v297, %v302
      %v311 = vadd.f32 %v297, %v303
      %v312 = vadd.f32 %v297, %v304
      %v313 = vadd.f32 %v297, %v305
      %v314 = vadd.f32 %v297, %v306
      %v315 = vadd.f32 %v297, %v307
      %v316 = vperm.slane %v292, 1
      %v317 = vmul.f32 %v272, %v316
      %v318 = vmul.f32 %v273, %v316
      %v319 = vmul.f32 %v274, %v316
      %v320 = vmul.f32 %v275, %v316
      %v321 = vmul.f32 %v276, %v316
      %v322 = vmul.f32 %v277, %v316
      %v323 = vmul.f32 %v278, %v316
      %v324 = vmul.f32 %v279, %v316
      %v325 = vmul.f32 %v280, %v316
      %v326 = vmul.f32 %v281, %v316
      %v327 = vmul.f32 %v282, %v316
      %v328 = vmul.f32 %v283, %v316
      %v329 = vmul.f32 %v284, %v316
      %v330 = vmul.f32 %v285, %v316
      %v331 = vmul.f32 %v286, %v316
      %v332 = vmul.f32 %v287, %v316
      %vm349 = vcmask 1046528
      %v350 = vrot.slane %v317, 1
      %v351 = vrot.slane %v318, 1
      %v352 = vsel %vm349, %v350, %v351
      %v353 = vrot.slane %v319, 1
      %v354 = vrot.slane %v320, 1
      %v355 = vsel %vm349, %v353, %v354
      %v356 = vrot.slane %v321, 1
      %v357 = vrot.slane %v322, 1
      %v358 = vsel %vm349, %v356, %v357
      %v359 = vrot.slane %v323, 1
      %v360 = vrot.slane %v324, 1
      %v361 = vsel %vm349, %v359, %v360
      %v362 = vrot.slane %v325, 1
      %v363 = vrot.slane %v326, 1
      %v364 = vsel %vm349, %v362, %v363
      %v365 = vrot.slane %v327, 1
      %v366 = vrot.slane %v328, 1
      %v367 = vsel %vm349, %v365, %v366
      %v368 = vrot.slane %v329, 1
      %v369 = vrot.slane %v330, 1
      %v370 = vsel %vm349, %v368, %v369
      %v371 = vrot.slane %v331, 1
      %v372 = vrot.slane %v332, 1
      %v373 = vsel %vm349, %v371, %v372
      %v382 = vadd.f32 %v308, %v352
      %v383 = vadd.f32 %v309, %v355
      %v384 = vadd.f32 %v310, %v358
      %v385 = vadd.f32 %v311, %v361
      %v386 = vadd.f32 %v312, %v364
      %v387 = vadd.f32 %v313, %v367
      %v388 = vadd.f32 %v314, %v370
      %v389 = vadd.f32 %v315, %v373
      %v390 = vperm.slane %v292, 2
      %v391 = vmul.f32 %v272, %v390
      %v392 = vmul.f32 %v273, %v390
      %v393 = vmul.f32 %v274, %v390
      %v394 = vmul.f32 %v275, %v390
      %v395 = vmul.f32 %v276, %v390
      %v396 = vmul.f32 %v277, %v390
      %v397 = vmul.f32 %v278, %v390
      %v398 = vmul.f32 %v279, %v390
      %v399 = vmul.f32 %v280, %v390
      %v400 = vmul.f32 %v281, %v390
      %v401 = vmul.f32 %v282, %v390
      %v402 = vmul.f32 %v283, %v390
      %v403 = vmul.f32 %v284, %v390
      %v404 = vmul.f32 %v285, %v390
      %v405 = vmul.f32 %v286, %v390
      %v406 = vmul.f32 %v287, %v390
      %vm423 = vcmask 1045504
      %v424 = vrot.slane %v391, 2
      %v425 = vrot.slane %v392, 2
      %v426 = vsel %vm423, %v424, %v425
      %v427 = vrot.slane %v393, 2
      %v428 = vrot.slane %v394, 2
      %v429 = vsel %vm423, %v427, %v428
      %v430 = vrot.slane %v395, 2
      %v431 = vrot.slane %v396, 2
      %v432 = vsel %vm423, %v430, %v431
      %v433 = vrot.slane %v397, 2
      %v434 = vrot.slane %v398, 2
      %v435 = vsel %vm423, %v433, %v434
      %v436 = vrot.slane %v399, 2
      %v437 = vrot.slane %v400, 2
      %v438 = vsel %vm423, %v436, %v437
      %v439 = vrot.slane %v401, 2
      %v440 = vrot.slane %v402, 2
      %v441 = vsel %vm423, %v439, %v440
      %v442 = vrot.slane %v403, 2
      %v443 = vrot.slane %v404, 2
      %v444 = vsel %vm423, %v442, %v443
      %v445 = vrot.slane %v405, 2
      %v446 = vrot.slane %v406, 2
      %v447 = vsel %vm423, %v445, %v446
      %v456 = vadd.f32 %v382, %v426
      %v457 = vadd.f32 %v383, %v429
      %v458 = vadd.f32 %v384, %v432
      %v459 = vadd.f32 %v385, %v435
      %v460 = vadd.f32 %v386, %v438
      %v461 = vadd.f32 %v387, %v441
      %v462 = vadd.f32 %v388, %v444
      %v463 = vadd.f32 %v389, %v447
      %v464 = vperm.slane %v293, 0
      %v465 = vmul.f32 %v274, %v464
      %v466 = vmul.f32 %v276, %v464
      %v467 = vmul.f32 %v278, %v464
      %v468 = vmul.f32 %v280, %v464
      %v469 = vmul.f32 %v282, %v464
      %v470 = vmul.f32 %v284, %v464
      %v471 = vmul.f32 %v286, %v464
      %v472 = vmul.f32 %v288, %v464
      %v473 = vadd.f32 %v456, %v465
      %v474 = vadd.f32 %v457, %v466
      %v475 = vadd.f32 %v458, %v467
      %v476 = vadd.f32 %v459, %v468
      %v477 = vadd.f32 %v460, %v469
      %v478 = vadd.f32 %v461, %v470
      %v479 = vadd.f32 %v462, %v471
      %v480 = vadd.f32 %v463, %v472
      %v481 = vperm.slane %v293, 1
      %v482 = vmul.f32 %v274, %v481
      %v483 = vmul.f32 %v275, %v481
      %v484 = vmul.f32 %v276, %v481
      %v485 = vmul.f32 %v277, %v481
      %v486 = vmul.f32 %v278, %v481
      %v487 = vmul.f32 %v279, %v481
      %v488 = vmul.f32 %v280, %v481
      %v489 = vmul.f32 %v281, %v481
      %v490 = vmul.f32 %v282, %v481
      %v491 = vmul.f32 %v283, %v481
      %v492 = vmul.f32 %v284, %v481
      %v493 = vmul.f32 %v285, %v481
      %v494 = vmul.f32 %v286, %v481
      %v495 = vmul.f32 %v287, %v481
      %v496 = vmul.f32 %v288, %v481
      %v497 = vmul.f32 %v289, %v481
      %v514 = vrot.slane %v482, 1
      %v515 = vrot.slane %v483, 1
      %v516 = vsel %vm349, %v514, %v515
      %v517 = vrot.slane %v484, 1
      %v518 = vrot.slane %v485, 1
      %v519 = vsel %vm349, %v517, %v518
      %v520 = vrot.slane %v486, 1
      %v521 = vrot.slane %v487, 1
      %v522 = vsel %vm349, %v520, %v521
      %v523 = vrot.slane %v488, 1
      %v524 = vrot.slane %v489, 1
      %v525 = vsel %vm349, %v523, %v524
      %v526 = vrot.slane %v490, 1
      %v527 = vrot.slane %v491, 1
      %v528 = vsel %vm349, %v526, %v527
      %v529 = vrot.slane %v492, 1
      %v530 = vrot.slane %v493, 1
      %v531 = vsel %vm349, %v529, %v530
      %v532 = vrot.slane %v494, 1
      %v533 = vrot.slane %v495, 1
      %v534 = vsel %vm349, %v532, %v533
      %v535 = vrot.slane %v496, 1
      %v536 = vrot.slane %v497, 1
      %v537 = vsel %vm349, %v535, %v536
      %v546 = vadd.f32 %v473, %v516
      %v547 = vadd.f32 %v474, %v519
      %v548 = vadd.f32 %v475, %v522
      %v549 = vadd.f32 %v476, %v525
      %v550 = vadd.f32 %v477, %v528
      %v551 = vadd.f32 %v478, %v531
      %v552 = vadd.f32 %v479, %v534
      %v553 = vadd.f32 %v480, %v537
      %v554 = vperm.slane %v293, 2
      %v555 = vmul.f32 %v274, %v554
      %v556 = vmul.f32 %v275, %v554
      %v557 = vmul.f32 %v276, %v554
      %v558 = vmul.f32 %v277, %v554
      %v559 = vmul.f32 %v278, %v554
      %v560 = vmul.f32 %v279, %v554
      %v561 = vmul.f32 %v280, %v554
      %v562 = vmul.f32 %v281, %v554
      %v563 = vmul.f32 %v282, %v554
      %v564 = vmul.f32 %v283, %v554
      %v565 = vmul.f32 %v284, %v554
      %v566 = vmul.f32 %v285, %v554
      %v567 = vmul.f32 %v286, %v554
      %v568 = vmul.f32 %v287, %v554
      %v569 = vmul.f32 %v288, %v554
      %v570 = vmul.f32 %v289, %v554
      %v587 = vrot.slane %v555, 2
      %v588 = vrot.slane %v556, 2
      %v589 = vsel %vm423, %v587, %v588
      %v590 = vrot.slane %v557, 2
      %v591 = vrot.slane %v558, 2
      %v592 = vsel %vm423, %v590, %v591
      %v593 = vrot.slane %v559, 2
      %v594 = vrot.slane %v560, 2
      %v595 = vsel %vm423, %v593, %v594
      %v596 = vrot.slane %v561, 2
      %v597 = vrot.slane %v562, 2
      %v598 = vsel %vm423, %v596, %v597
      %v599 = vrot.slane %v563, 2
      %v600 = vrot.slane %v564, 2
      %v601 = vsel %vm423, %v599, %v600
      %v602 = vrot.slane %v565, 2
      %v603 = vrot.slane %v566, 2
      %v604 = vsel %vm423, %v602, %v603
      %v605 = vrot.slane %v567, 2
      %v606 = vrot.slane %v568, 2
      %v607 = vsel %vm423, %v605, %v606
      %v608 = vrot.slane %v569, 2
      %v609 = vrot.slane %v570, 2
      %v610 = vsel %vm423, %v608, %v609
      %v619 = vadd.f32 %v546, %v589
      %v620 = vadd.f32 %v547, %v592
      %v621 = vadd.f32 %v548, %v595
      %v622 = vadd.f32 %v549, %v598
      %v623 = vadd.f32 %v550, %v601
      %v624 = vadd.f32 %v551, %v604
      %v625 = vadd.f32 %v552, %v607
      %v626 = vadd.f32 %v553, %v610
      %v627 = vperm.slane %v294, 0
      %v628 = vmul.f32 %v276, %v627
      %v629 = vmul.f32 %v278, %v627
      %v630 = vmul.f32 %v280, %v627
      %v631 = vmul.f32 %v282, %v627
      %v632 = vmul.f32 %v284, %v627
      %v633 = vmul.f32 %v286, %v627
      %v634 = vmul.f32 %v288, %v627
      %v635 = vmul.f32 %v290, %v627
      %v636 = vadd.f32 %v619, %v628
      %v637 = vadd.f32 %v620, %v629
      %v638 = vadd.f32 %v621, %v630
      %v639 = vadd.f32 %v622, %v631
      %v640 = vadd.f32 %v623, %v632
      %v641 = vadd.f32 %v624, %v633
      %v642 = vadd.f32 %v625, %v634
      %v643 = vadd.f32 %v626, %v635
      %v644 = vperm.slane %v294, 1
      %v645 = vmul.f32 %v276, %v644
      %v646 = vmul.f32 %v277, %v644
      %v647 = vmul.f32 %v278, %v644
      %v648 = vmul.f32 %v279, %v644
      %v649 = vmul.f32 %v280, %v644
      %v650 = vmul.f32 %v281, %v644
      %v651 = vmul.f32 %v282, %v644
      %v652 = vmul.f32 %v283, %v644
      %v653 = vmul.f32 %v284, %v644
      %v654 = vmul.f32 %v285, %v644
      %v655 = vmul.f32 %v286, %v644
      %v656 = vmul.f32 %v287, %v644
      %v657 = vmul.f32 %v288, %v644
      %v658 = vmul.f32 %v289, %v644
      %v659 = vmul.f32 %v290, %v644
      %v660 = vmul.f32 %v291, %v644
      %v677 = vrot.slane %v645, 1
      %v678 = vrot.slane %v646, 1
      %v679 = vsel %vm349, %v677, %v678
      %v680 = vrot.slane %v647, 1
      %v681 = vrot.slane %v648, 1
      %v682 = vsel %vm349, %v680, %v681
      %v683 = vrot.slane %v649, 1
      %v684 = vrot.slane %v650, 1
      %v685 = vsel %vm349, %v683, %v684
      %v686 = vrot.slane %v651, 1
      %v687 = vrot.slane %v652, 1
      %v688 = vsel %vm349, %v686, %v687
      %v689 = vrot.slane %v653, 1
      %v690 = vrot.slane %v654, 1
      %v691 = vsel %vm349, %v689, %v690
      %v692 = vrot.slane %v655, 1
      %v693 = vrot.slane %v656, 1
      %v694 = vsel %vm349, %v692, %v693
      %v695 = vrot.slane %v657, 1
      %v696 = vrot.slane %v658, 1
      %v697 = vsel %vm349, %v695, %v696
      %v698 = vrot.slane %v659, 1
      %v699 = vrot.slane %v660, 1
      %v700 = vsel %vm349, %v698, %v699
      %v709 = vadd.f32 %v636, %v679
      %v710 = vadd.f32 %v637, %v682
      %v711 = vadd.f32 %v638, %v685
      %v712 = vadd.f32 %v639, %v688
      %v713 = vadd.f32 %v640, %v691
      %v714 = vadd.f32 %v641, %v694
      %v715 = vadd.f32 %v642, %v697
      %v716 = vadd.f32 %v643, %v700
      %v717 = vperm.slane %v294, 2
      %v718 = vmul.f32 %v276, %v717
      %v719 = vmul.f32 %v277, %v717
      %v720 = vmul.f32 %v278, %v717
      %v721 = vmul.f32 %v279, %v717
      %v722 = vmul.f32 %v280, %v717
      %v723 = vmul.f32 %v281, %v717
      %v724 = vmul.f32 %v282, %v717
      %v725 = vmul.f32 %v283, %v717
      %v726 = vmul.f32 %v284, %v717
      %v727 = vmul.f32 %v285, %v717
      %v728 = vmul.f32 %v286, %v717
      %v729 = vmul.f32 %v287, %v717
      %v730 = vmul.f32 %v288, %v717
      %v731 = vmul.f32 %v289, %v717
      %v732 = vmul.f32 %v290, %v717
      %v733 = vmul.f32 %v291, %v717
      %v750 = vrot.slane %v718, 2
      %v751 = vrot.slane %v719, 2
      %v752 = vsel %vm423, %v750, %v751
      %v753 = vrot.slane %v720, 2
      %v754 = vrot.slane %v721, 2
      %v755 = vsel %vm423, %v753, %v754
      %v756 = vrot.slane %v722, 2
      %v757 = vrot.slane %v723, 2
      %v758 = vsel %vm423, %v756, %v757
      %v759 = vrot.slane %v724, 2
      %v760 = vrot.slane %v725, 2
      %v761 = vsel %vm423, %v759, %v760
      %v762 = vrot.slane %v726, 2
      %v763 = vrot.slane %v727, 2
      %v764 = vsel %vm423, %v762, %v763
      %v765 = vrot.slane %v728, 2
      %v766 = vrot.slane %v729, 2
      %v767 = vsel %vm423, %v765, %v766
      %v768 = vrot.slane %v730, 2
      %v769 = vrot.slane %v731, 2
      %v770 = vsel %vm423, %v768, %v769
      %v771 = vrot.slane %v732, 2
      %v772 = vrot.slane %v733, 2
      %v773 = vsel %vm423, %v771, %v772
      %v782 = vadd.f32 %v709, %v752
      %v783 = vadd.f32 %v710, %v755
      %v784 = vadd.f32 %v711, %v758
      %v785 = vadd.f32 %v712, %v761
      %v786 = vadd.f32 %v713, %v764
      %v787 = vadd.f32 %v714, %v767
      %v788 = vadd.f32 %v715, %v770
      %v789 = vadd.f32 %v716, %v773
      %v790 = vmul.f32 %v782, 0.5
      %v791 = vmul.f32 %v783, 0.5
      %v792 = vmul.f32 %v784, 0.5
      %v793 = vmul.f32 %v785, 0.5
      %v794 = vmul.f32 %v786, 0.5
      %v795 = vmul.f32 %v787, 0.5
      %v796 = vmul.f32 %v788, 0.5
      %v797 = vmul.f32 %v789, 0.5
      %v798 = vmul.f32 %v782, 0.044715
      %v799 = vmul.f32 %v783, 0.044715
      %v800 = vmul.f32 %v784, 0.044715
      %v801 = vmul.f32 %v785, 0.044715
      %v802 = vmul.f32 %v786, 0.044715
      %v803 = vmul.f32 %v787, 0.044715
      %v804 = vmul.f32 %v788, 0.044715
      %v805 = vmul.f32 %v789, 0.044715
      %v806 = vmul.f32 %v798, %v782
      %v807 = vmul.f32 %v799, %v783
      %v808 = vmul.f32 %v800, %v784
      %v809 = vmul.f32 %v801, %v785
      %v810 = vmul.f32 %v802, %v786
      %v811 = vmul.f32 %v803, %v787
      %v812 = vmul.f32 %v804, %v788
      %v813 = vmul.f32 %v805, %v789
      %v814 = vmul.f32 %v806, %v782
      %v815 = vmul.f32 %v807, %v783
      %v816 = vmul.f32 %v808, %v784
      %v817 = vmul.f32 %v809, %v785
      %v818 = vmul.f32 %v810, %v786
      %v819 = vmul.f32 %v811, %v787
      %v820 = vmul.f32 %v812, %v788
      %v821 = vmul.f32 %v813, %v789
      %v822 = vadd.f32 %v782, %v814
      %v823 = vadd.f32 %v783, %v815
      %v824 = vadd.f32 %v784, %v816
      %v825 = vadd.f32 %v785, %v817
      %v826 = vadd.f32 %v786, %v818
      %v827 = vadd.f32 %v787, %v819
      %v828 = vadd.f32 %v788, %v820
      %v829 = vadd.f32 %v789, %v821
      %v830 = vmul.f32 %v822, 0.7978846
      %v831 = vmul.f32 %v823, 0.7978846
      %v832 = vmul.f32 %v824, 0.7978846
      %v833 = vmul.f32 %v825, 0.7978846
      %v834 = vmul.f32 %v826, 0.7978846
      %v835 = vmul.f32 %v827, 0.7978846
      %v836 = vmul.f32 %v828, 0.7978846
      %v837 = vmul.f32 %v829, 0.7978846
      %v838 = vtanh.pop %v830
      %v839 = vtanh.pop %v831
      %v840 = vtanh.pop %v832
      %v841 = vtanh.pop %v833
      %v842 = vtanh.pop %v834
      %v843 = vtanh.pop %v835
      %v844 = vtanh.pop %v836
      %v845 = vtanh.pop %v837
      %v846 = vadd.f32 %v838, 1.0
      %v847 = vadd.f32 %v839, 1.0
      %v848 = vadd.f32 %v840, 1.0
      %v849 = vadd.f32 %v841, 1.0
      %v850 = vadd.f32 %v842, 1.0
      %v851 = vadd.f32 %v843, 1.0
      %v852 = vadd.f32 %v844, 1.0
      %v853 = vadd.f32 %v845, 1.0
      %v854 = vmul.f32 %v790, %v846
      %v855 = vmul.f32 %v791, %v847
      %v856 = vmul.f32 %v792, %v848
      %v857 = vmul.f32 %v793, %v849
      %v858 = vmul.f32 %v794, %v850
      %v859 = vmul.f32 %v795, %v851
      %v860 = vmul.f32 %v796, %v852
      %v861 = vmul.f32 %v797, %v853
      %862 = vst.msk [vmem:[%s232] sm:$0xff] %vm233, %v854
      %863 = vst.msk [vmem:[%s232 + $0x8] sm:$0xff] %vm233, %v855
      %864 = vst.msk [vmem:[%s232 + $0x10] sm:$0xff] %vm233, %v856
      %865 = vst.msk [vmem:[%s232 + $0x18] sm:$0xff] %vm233, %v857
      %866 = vst.msk [vmem:[%s232 + $0x20] sm:$0xff] %vm233, %v858
      %867 = vst.msk [vmem:[%s232 + $0x28] sm:$0xff] %vm233, %v859
      %868 = vst.msk [vmem:[%s232 + $0x30] sm:$0xff] %vm233, %v860
      %869 = vst.msk [vmem:[%s232 + $0x38] sm:$0xff] %vm233, %v861
      %p870 = scmp.lt.s32.totalorder %s18, 1
      %s871 = scalar_select %p870, %s18, 1
      %p872 = scmp.lt.s32.totalorder %s19, 0
      %s873 = scalar_select %p872, %s19, 0
      %s874 = smul.addr %s871, 8
      %s875 = sadd.s32 %s873, %s874
      %s876 = smul.addr %s875, 8
      %s877 = scalar_lea.vmem %s3, %s876
      // Predicated region
      $region33: #{mixffn_forward.4} parent=31 // pred_check
        %p878 = pneg %p126
      $region34: #{mixffn_forward.4} parent=31 // pred_check_branch
        %880 = sbr.rel (%p878) target = $region36
      $region35: #{mixffn_forward.4} parent=31 // pred_region
        _
      $region36: #{mixffn_forward.4} parent=31 // pred_fallthru
        _
    $region32: #{mixffn_forward.4} parent=5 // pred_fallthru
      _
    %p881 = scmp.le.s32.totalorder 2, %s9
    // Predicated region
    $region37: #{mixffn_forward.4} parent=5 // pred_check
      %p882 = pneg %p881
    $region38: #{mixffn_forward.4} parent=5 // pred_check_branch
      %884 = sbr.rel (%p882) target = $region40
    $region39: #{mixffn_forward.4} parent=5 // pred_region
      %s885 = ssub.s32 %s9, 2
      // Predicated region
      $region41: #{mixffn_forward.4} parent=39 // pred_check
        %p886 = pneg %p132
      $region42: #{mixffn_forward.4} parent=39 // pred_check_branch
        %888 = sbr.rel (%p886) target = $region44
      $region43: #{mixffn_forward.4} parent=39 // pred_region
        %p889 = scmp.lt.s32.totalorder %s20, 1
        %s890 = scalar_select %p889, %s20, 1
        %p891 = scmp.lt.s32.totalorder %s21, 0
        %s892 = scalar_select %p891, %s21, 0
        %s893 = smul.addr %s890, 8
        %s894 = sadd.s32 %s892, %s893
        %s895 = smul.addr %s894, 8
        %s896 = scalar_lea.vmem %s3, %s895
      $region44: #{mixffn_forward.4} parent=39 // pred_fallthru
        _
    $region40: #{mixffn_forward.4} parent=5 // pred_fallthru
      _
  $region6: #{mixffn_forward.4} parent=0 // loop_footer
    %s13 = sadd.s32 1, %s9
  $region7: #{mixffn_forward.4} parent=0 // loop_footer_branch
    %8 = sbr.rel target = $region3
  $region8: #{mixffn_forward.4} parent=0 // loop_exit
    _

// kernel: mixffn_forward.5
$region0: #{mixffn_forward.5}
  #allocation0 [shape = 'u32[]', space=smem, size = 0x4, offset = 0x4, fixed_abs, tag = 'smem constant byte address 0x4 - core index']
  #allocation1 [shape = 'u32[72,128]{1,0:T(1,128)}', space=vmem, size = 0x9000, scoped, tag = 'internal scratch']
  #allocation2 [shape = 'f32[128,32]{1,0:T(8,128)}', space=vmem, size = 0x10000, scoped, tag = 'scratch operand']
  %s0 = inlined_call_operand.vmem [shape: f32[128,64], index: 0, kind: input, shape index: {}]
  %s1 = inlined_call_operand.vmem [shape: f32[64,32], index: 1, kind: input, shape index: {}]
  %s2 = inlined_call_operand.vmem [shape: f32[1,32], index: 2, kind: input, shape index: {}]
  %s3 = inlined_call_operand.vmem [shape: f32[128,32], index: 3, kind: input, shape index: {}]
  %s4 = inlined_call_operand.vmem [shape: f32[128,32], index: 4, kind: output, shape index: {}]
  %s5 = sld [smem:[#allocation0]]
  $region34: #{mixffn_forward.5} parent=0
    _
  %s7 = ssub.s32 1, %s5
  %s8 = scalar_select 0, %s7, %s5
  // Predicated region
  $region2: #{mixffn_forward.5} parent=0 // pred_check
    _
  $region3: #{mixffn_forward.5} parent=0 // pred_check_branch
    %10 = sbr.rel (0) target = $region5
  $region4: #{mixffn_forward.5} parent=0 // pred_region
    _
  $region5: #{mixffn_forward.5} parent=0 // pred_fallthru
    _
  // Predicated region
  $region6: #{mixffn_forward.5} parent=0 // pred_check
    _
  $region7: #{mixffn_forward.5} parent=0 // pred_check_branch
    %12 = sbr.rel (0) target = $region9
  $region8: #{mixffn_forward.5} parent=0 // pred_region
    _
  $region9: #{mixffn_forward.5} parent=0 // pred_fallthru
    _
  // Predicated region
  $region10: #{mixffn_forward.5} parent=0 // pred_check
    _
  $region11: #{mixffn_forward.5} parent=0 // pred_check_branch
    %14 = sbr.rel (0) target = $region13
  $region12: #{mixffn_forward.5} parent=0 // pred_region
    _
  $region13: #{mixffn_forward.5} parent=0 // pred_fallthru
    _
  // Predicated region
  $region14: #{mixffn_forward.5} parent=0 // pred_check
    _
  $region15: #{mixffn_forward.5} parent=0 // pred_check_branch
    %16 = sbr.rel (0) target = $region17
  $region16: #{mixffn_forward.5} parent=0 // pred_region
    _
  $region17: #{mixffn_forward.5} parent=0 // pred_fallthru
    _
  %p17 = scmp.eq.s32.totalorder 0, 0
  // Predicated region
  $region18: #{mixffn_forward.5} parent=0 // pred_check
    %p18 = pneg %p17
  $region19: #{mixffn_forward.5} parent=0 // pred_check_branch
    %20 = sbr.rel (%p18) target = $region21
  $region20: #{mixffn_forward.5} parent=0 // pred_region
    %vm21 = vcmask 261120
    %22 = vst.msk [vmem:[#allocation2] sm:$0xff] %vm21, 0.0
    %23 = vst.msk [vmem:[#allocation2 + $0x8] sm:$0xff] %vm21, 0.0
    %24 = vst.msk [vmem:[#allocation2 + $0x10] sm:$0xff] %vm21, 0.0
    %25 = vst.msk [vmem:[#allocation2 + $0x18] sm:$0xff] %vm21, 0.0
    %26 = vst.msk [vmem:[#allocation2 + $0x20] sm:$0xff] %vm21, 0.0
    %27 = vst.msk [vmem:[#allocation2 + $0x28] sm:$0xff] %vm21, 0.0
    %28 = vst.msk [vmem:[#allocation2 + $0x30] sm:$0xff] %vm21, 0.0
    %29 = vst.msk [vmem:[#allocation2 + $0x38] sm:$0xff] %vm21, 0.0
    %30 = vst.msk [vmem:[#allocation2 + $0x40] sm:$0xff] %vm21, 0.0
    %31 = vst.msk [vmem:[#allocation2 + $0x48] sm:$0xff] %vm21, 0.0
    %32 = vst.msk [vmem:[#allocation2 + $0x50] sm:$0xff] %vm21, 0.0
    %33 = vst.msk [vmem:[#allocation2 + $0x58] sm:$0xff] %vm21, 0.0
    %34 = vst.msk [vmem:[#allocation2 + $0x60] sm:$0xff] %vm21, 0.0
    %35 = vst.msk [vmem:[#allocation2 + $0x68] sm:$0xff] %vm21, 0.0
    %36 = vst.msk [vmem:[#allocation2 + $0x70] sm:$0xff] %vm21, 0.0
    %37 = vst.msk [vmem:[#allocation2 + $0x78] sm:$0xff] %vm21, 0.0
  $region21: #{mixffn_forward.5} parent=0 // pred_fallthru
    _
  %v38 = vld [vmem:[#allocation2] sm:$0xff]
  %v39 = vld [vmem:[#allocation2 + $0x8] sm:$0xff]
  %v40 = vld [vmem:[#allocation2 + $0x10] sm:$0xff]
  %v41 = vld [vmem:[#allocation2 + $0x18] sm:$0xff]
  %v42 = vld [vmem:[#allocation2 + $0x20] sm:$0xff]
  %v43 = vld [vmem:[#allocation2 + $0x28] sm:$0xff]
  %v44 = vld [vmem:[#allocation2 + $0x30] sm:$0xff]
  %v45 = vld [vmem:[#allocation2 + $0x38] sm:$0xff]
  %v46 = vld [vmem:[#allocation2 + $0x40] sm:$0xff]
  %v47 = vld [vmem:[#allocation2 + $0x48] sm:$0xff]
  %v48 = vld [vmem:[#allocation2 + $0x50] sm:$0xff]
  %v49 = vld [vmem:[#allocation2 + $0x58] sm:$0xff]
  %v50 = vld [vmem:[#allocation2 + $0x60] sm:$0xff]
  %v51 = vld [vmem:[#allocation2 + $0x68] sm:$0xff]
  %v52 = vld [vmem:[#allocation2 + $0x70] sm:$0xff]
  %v53 = vld [vmem:[#allocation2 + $0x78] sm:$0xff]
  %v54 = vld [vmem:[%s0] sm:$0xff]
  %v55 = vld [vmem:[%s0 + $0x8] sm:$0xff]
  %v56 = vld [vmem:[%s0 + $0x10] sm:$0xff]
  %v57 = vld [vmem:[%s0 + $0x18] sm:$0xff]
  %v58 = vld [vmem:[%s0 + $0x20] sm:$0xff]
  %v59 = vld [vmem:[%s0 + $0x28] sm:$0xff]
  %v60 = vld [vmem:[%s0 + $0x30] sm:$0xff]
  %v61 = vld [vmem:[%s0 + $0x38] sm:$0xff]
  %v62 = vld [vmem:[%s0 + $0x40] sm:$0xff]
  %v63 = vld [vmem:[%s0 + $0x48] sm:$0xff]
  %v64 = vld [vmem:[%s0 + $0x50] sm:$0xff]
  %v65 = vld [vmem:[%s0 + $0x58] sm:$0xff]
  %v66 = vld [vmem:[%s0 + $0x60] sm:$0xff]
  %v67 = vld [vmem:[%s0 + $0x68] sm:$0xff]
  %v68 = vld [vmem:[%s0 + $0x70] sm:$0xff]
  %v69 = vld [vmem:[%s0 + $0x78] sm:$0xff]
  %v70 = vld [vmem:[%s1] sm:$0xff]
  %v71 = vld [vmem:[%s1 + $0x8] sm:$0xff]
  %v72 = vld [vmem:[%s1 + $0x10] sm:$0xff]
  %v73 = vld [vmem:[%s1 + $0x18] sm:$0xff]
  %v74 = vld [vmem:[%s1 + $0x20] sm:$0xff]
  %v75 = vld [vmem:[%s1 + $0x28] sm:$0xff]
  %v76 = vld [vmem:[%s1 + $0x30] sm:$0xff]
  %v77 = vld [vmem:[%s1 + $0x38] sm:$0xff]
  %vm78 = vcmask 523264
  %v80 = vsel %vm78, %v54, 0
  %v83 = vsel %vm78, %v55, 0
  %v86 = vsel %vm78, %v56, 0
  %v89 = vsel %vm78, %v57, 0
  %v92 = vsel %vm78, %v58, 0
  %v95 = vsel %vm78, %v59, 0
  %v98 = vsel %vm78, %v60, 0
  %v101 = vsel %vm78, %v61, 0
  %v104 = vsel %vm78, %v62, 0
  %v107 = vsel %vm78, %v63, 0
  %v110 = vsel %vm78, %v64, 0
  %v113 = vsel %vm78, %v65, 0
  %v116 = vsel %vm78, %v66, 0
  %v119 = vsel %vm78, %v67, 0
  %v122 = vsel %vm78, %v68, 0
  %v125 = vsel %vm78, %v69, 0
  %127 = vmatpush.msra.mxu0 0.0
  %128 = vmatpush.msra.mxu0 0.0
  %129 = vmatpush.msra.mxu0 0.0
  %130 = vmatpush.msra.mxu0 0.0
  %131 = vmatpush.msra.mxu0 0.0
  %132 = vmatpush.msra.mxu0 0.0
  %133 = vmatpush.msra.mxu0 0.0
  %134 = vmatpush.msra.mxu0 0.0
  %135 = vmatpush.msra.mxu0 %v77
  %136 = vmatpush.msra.mxu0 %v76
  %137 = vmatpush.msra.mxu0 %v75
  %138 = vmatpush.msra.mxu0 %v74
  %139 = vmatpush.msra.mxu0 %v73
  %140 = vmatpush.msra.mxu0 %v72
  %141 = vmatpush.msra.mxu0 %v71
  %142 = vmatpush.msra.mxu0 %v70
  %143 = vmatmul.f32.gmra.mxu0 %v80
  %v144 = vpop.f32.mrf.mxu0
  %v145 = vadd.f32 0.0, %v144
  %146 = vmatmul.f32.gmra.mxu0 %v83
  %v147 = vpop.f32.mrf.mxu0
  %v148 = vadd.f32 0.0, %v147
  %149 = vmatmul.f32.gmra.mxu0 %v86
  %v150 = vpop.f32.mrf.mxu0
  %v151 = vadd.f32 0.0, %v150
  %152 = vmatmul.f32.gmra.mxu0 %v89
  %v153 = vpop.f32.mrf.mxu0
  %v154 = vadd.f32 0.0, %v153
  %155 = vmatmul.f32.gmra.mxu0 %v92
  %v156 = vpop.f32.mrf.mxu0
  %v157 = vadd.f32 0.0, %v156
  %158 = vmatmul.f32.gmra.mxu0 %v95
  %v159 = vpop.f32.mrf.mxu0
  %v160 = vadd.f32 0.0, %v159
  %161 = vmatmul.f32.gmra.mxu0 %v98
  %v162 = vpop.f32.mrf.mxu0
  %v163 = vadd.f32 0.0, %v162
  %164 = vmatmul.f32.gmra.mxu0 %v101
  %v165 = vpop.f32.mrf.mxu0
  %v166 = vadd.f32 0.0, %v165
  %167 = vmatmul.f32.gmra.mxu0 %v104
  %v168 = vpop.f32.mrf.mxu0
  %v169 = vadd.f32 0.0, %v168
  %170 = vmatmul.f32.gmra.mxu0 %v107
  %v171 = vpop.f32.mrf.mxu0
  %v172 = vadd.f32 0.0, %v171
  %173 = vmatmul.f32.gmra.mxu0 %v110
  %v174 = vpop.f32.mrf.mxu0
  %v175 = vadd.f32 0.0, %v174
  %176 = vmatmul.f32.gmra.mxu0 %v113
  %v177 = vpop.f32.mrf.mxu0
  %v178 = vadd.f32 0.0, %v177
  %179 = vmatmul.f32.gmra.mxu0 %v116
  %v180 = vpop.f32.mrf.mxu0
  %v181 = vadd.f32 0.0, %v180
  %182 = vmatmul.f32.gmra.mxu0 %v119
  %v183 = vpop.f32.mrf.mxu0
  %v184 = vadd.f32 0.0, %v183
  %185 = vmatmul.f32.gmra.mxu0 %v122
  %v186 = vpop.f32.mrf.mxu0
  %v187 = vadd.f32 0.0, %v186
  %188 = vmatmul.f32.gmra.mxu0 %v125
  %v189 = vpop.f32.mrf.mxu0
  %v190 = vadd.f32 0.0, %v189
  %191 = vdwg.mxu0
  %v192 = vadd.f32 %v38, %v145
  %v193 = vadd.f32 %v39, %v148
  %v194 = vadd.f32 %v40, %v151
  %v195 = vadd.f32 %v41, %v154
  %v196 = vadd.f32 %v42, %v157
  %v197 = vadd.f32 %v43, %v160
  %v198 = vadd.f32 %v44, %v163
  %v199 = vadd.f32 %v45, %v166
  %v200 = vadd.f32 %v46, %v169
  %v201 = vadd.f32 %v47, %v172
  %v202 = vadd.f32 %v48, %v175
  %v203 = vadd.f32 %v49, %v178
  %v204 = vadd.f32 %v50, %v181
  %v205 = vadd.f32 %v51, %v184
  %v206 = vadd.f32 %v52, %v187
  %v207 = vadd.f32 %v53, %v190
  %vm208 = vcmask 261120
  %209 = vst.msk [vmem:[#allocation2] sm:$0xff] %vm208, %v192
  %210 = vst.msk [vmem:[#allocation2 + $0x8] sm:$0xff] %vm208, %v193
  %211 = vst.msk [vmem:[#allocation2 + $0x10] sm:$0xff] %vm208, %v194
  %212 = vst.msk [vmem:[#allocation2 + $0x18] sm:$0xff] %vm208, %v195
  %213 = vst.msk [vmem:[#allocation2 + $0x20] sm:$0xff] %vm208, %v196
  %214 = vst.msk [vmem:[#allocation2 + $0x28] sm:$0xff] %vm208, %v197
  %215 = vst.msk [vmem:[#allocation2 + $0x30] sm:$0xff] %vm208, %v198
  %216 = vst.msk [vmem:[#allocation2 + $0x38] sm:$0xff] %vm208, %v199
  %217 = vst.msk [vmem:[#allocation2 + $0x40] sm:$0xff] %vm208, %v200
  %218 = vst.msk [vmem:[#allocation2 + $0x48] sm:$0xff] %vm208, %v201
  %219 = vst.msk [vmem:[#allocation2 + $0x50] sm:$0xff] %vm208, %v202
  %220 = vst.msk [vmem:[#allocation2 + $0x58] sm:$0xff] %vm208, %v203
  %221 = vst.msk [vmem:[#allocation2 + $0x60] sm:$0xff] %vm208, %v204
  %222 = vst.msk [vmem:[#allocation2 + $0x68] sm:$0xff] %vm208, %v205
  %223 = vst.msk [vmem:[#allocation2 + $0x70] sm:$0xff] %vm208, %v206
  %224 = vst.msk [vmem:[#allocation2 + $0x78] sm:$0xff] %vm208, %v207
  // Predicated region
  $region22: #{mixffn_forward.5} parent=0 // pred_check
    %p225 = pneg %p17
  $region23: #{mixffn_forward.5} parent=0 // pred_check_branch
    %227 = sbr.rel (%p225) target = $region25
  $region24: #{mixffn_forward.5} parent=0 // pred_region
    %v228 = vld [vmem:[#allocation2] sm:$0xff]
    %v229 = vld [vmem:[#allocation2 + $0x8] sm:$0xff]
    %v230 = vld [vmem:[#allocation2 + $0x10] sm:$0xff]
    %v231 = vld [vmem:[#allocation2 + $0x18] sm:$0xff]
    %v232 = vld [vmem:[#allocation2 + $0x20] sm:$0xff]
    %v233 = vld [vmem:[#allocation2 + $0x28] sm:$0xff]
    %v234 = vld [vmem:[#allocation2 + $0x30] sm:$0xff]
    %v235 = vld [vmem:[#allocation2 + $0x38] sm:$0xff]
    %v236 = vld [vmem:[#allocation2 + $0x40] sm:$0xff]
    %v237 = vld [vmem:[#allocation2 + $0x48] sm:$0xff]
    %v238 = vld [vmem:[#allocation2 + $0x50] sm:$0xff]
    %v239 = vld [vmem:[#allocation2 + $0x58] sm:$0xff]
    %v240 = vld [vmem:[#allocation2 + $0x60] sm:$0xff]
    %v241 = vld [vmem:[#allocation2 + $0x68] sm:$0xff]
    %v242 = vld [vmem:[#allocation2 + $0x70] sm:$0xff]
    %v243 = vld [vmem:[#allocation2 + $0x78] sm:$0xff]
    %v244 = vld [vmem:[%s2] sm:$0x1]
    %v246 = vperm.slane %v244, 0
    %v248 = vadd.f32 %v228, %v246
    %v249 = vadd.f32 %v229, %v246
    %v250 = vadd.f32 %v230, %v246
    %v251 = vadd.f32 %v231, %v246
    %v252 = vadd.f32 %v232, %v246
    %v253 = vadd.f32 %v233, %v246
    %v254 = vadd.f32 %v234, %v246
    %v255 = vadd.f32 %v235, %v246
    %v256 = vadd.f32 %v236, %v246
    %v257 = vadd.f32 %v237, %v246
    %v258 = vadd.f32 %v238, %v246
    %v259 = vadd.f32 %v239, %v246
    %v260 = vadd.f32 %v240, %v246
    %v261 = vadd.f32 %v241, %v246
    %v262 = vadd.f32 %v242, %v246
    %v263 = vadd.f32 %v243, %v246
    %v264 = vld [vmem:[%s3] sm:$0xff]
    %v265 = vld [vmem:[%s3 + $0x8] sm:$0xff]
    %v266 = vld [vmem:[%s3 + $0x10] sm:$0xff]
    %v267 = vld [vmem:[%s3 + $0x18] sm:$0xff]
    %v268 = vld [vmem:[%s3 + $0x20] sm:$0xff]
    %v269 = vld [vmem:[%s3 + $0x28] sm:$0xff]
    %v270 = vld [vmem:[%s3 + $0x30] sm:$0xff]
    %v271 = vld [vmem:[%s3 + $0x38] sm:$0xff]
    %v272 = vld [vmem:[%s3 + $0x40] sm:$0xff]
    %v273 = vld [vmem:[%s3 + $0x48] sm:$0xff]
    %v274 = vld [vmem:[%s3 + $0x50] sm:$0xff]
    %v275 = vld [vmem:[%s3 + $0x58] sm:$0xff]
    %v276 = vld [vmem:[%s3 + $0x60] sm:$0xff]
    %v277 = vld [vmem:[%s3 + $0x68] sm:$0xff]
    %v278 = vld [vmem:[%s3 + $0x70] sm:$0xff]
    %v279 = vld [vmem:[%s3 + $0x78] sm:$0xff]
    %v280 = vadd.f32 %v248, %v264
    %v281 = vadd.f32 %v249, %v265
    %v282 = vadd.f32 %v250, %v266
    %v283 = vadd.f32 %v251, %v267
    %v284 = vadd.f32 %v252, %v268
    %v285 = vadd.f32 %v253, %v269
    %v286 = vadd.f32 %v254, %v270
    %v287 = vadd.f32 %v255, %v271
    %v288 = vadd.f32 %v256, %v272
    %v289 = vadd.f32 %v257, %v273
    %v290 = vadd.f32 %v258, %v274
    %v291 = vadd.f32 %v259, %v275
    %v292 = vadd.f32 %v260, %v276
    %v293 = vadd.f32 %v261, %v277
    %v294 = vadd.f32 %v262, %v278
    %v295 = vadd.f32 %v263, %v279
    %296 = vst.msk [vmem:[%s4] sm:$0xff] %vm208, %v280
    %297 = vst.msk [vmem:[%s4 + $0x8] sm:$0xff] %vm208, %v281
    %298 = vst.msk [vmem:[%s4 + $0x10] sm:$0xff] %vm208, %v282
    %299 = vst.msk [vmem:[%s4 + $0x18] sm:$0xff] %vm208, %v283
    %300 = vst.msk [vmem:[%s4 + $0x20] sm:$0xff] %vm208, %v284
    %301 = vst.msk [vmem:[%s4 + $0x28] sm:$0xff] %vm208, %v285
    %302 = vst.msk [vmem:[%s4 + $0x30] sm:$0xff] %vm208, %v286
    %303 = vst.msk [vmem:[%s4 + $0x38] sm:$0xff] %vm208, %v287
    %304 = vst.msk [vmem:[%s4 + $0x40] sm:$0xff] %vm208, %v288
    %305 = vst.msk [vmem:[%s4 + $0x48] sm:$0xff] %vm208, %v289
    %306 = vst.msk [vmem:[%s4 + $0x50] sm:$0xff] %vm208, %v290
    %307 = vst.msk [vmem:[%s4 + $0x58] sm:$0xff] %vm208, %v291
    %308 = vst.msk [vmem:[%s4 + $0x60] sm:$0xff] %vm208, %v292
    %309 = vst.msk [vmem:[%s4 + $0x68] sm:$0xff] %vm208, %v293
    %310 = vst.msk [vmem:[%s4 + $0x70] sm:$0xff] %vm208, %v294
    %311 = vst.msk [vmem:[%s4 + $0x78] sm:$0xff] %vm208, %v295
  $region25: #{mixffn_forward.5} parent=0 // pred_fallthru
    _
  // Predicated region
  $region26: #{mixffn_forward.5} parent=0 // pred_check
    _
  $region27: #{mixffn_forward.5} parent=0 // pred_check_branch
    %313 = sbr.rel (0) target = $region29
  $region28: #{mixffn_forward.5} parent=0 // pred_region
    _
  $region29: #{mixffn_forward.5} parent=0 // pred_fallthru
    _
  // Predicated region
  $region30: #{mixffn_forward.5} parent=0 // pred_check
    _
  $region31: #{mixffn_forward.5} parent=0 // pred_check_branch
    %315 = sbr.rel (0) target = $region33
  $region32: #{mixffn_forward.5} parent=0 // pred_region
    _
  $region33: #{mixffn_forward.5} parent=0 // pred_fallthru
    _

</llo_original>
